<compile_context>
chip_gen: v5e
topology: v5e:2x2
jax: 0.10.0
libtpu: 0.0.40
codegen_flags: <defaults>
</compile_context>

<pallas_src>
import functools

import jax
import jax.numpy as jnp
from jax.experimental import pallas as pl
from jax.experimental.pallas import tpu as pltpu


def _row_logsumexp(v):
    """logsumexp along axis=1 (keepdims), matching torch semantics for all -inf rows."""
    m = jnp.max(v, axis=1, keepdims=True)
    finite = m > -jnp.inf
    m_safe = jnp.where(finite, m, 0.0)
    s = jnp.sum(jnp.exp(v - m_safe), axis=1, keepdims=True)
    return jnp.where(finite, m_safe + jnp.log(s), m)


def _coref_loss_kernel(x_ref, y_ref, nlml_out_ref, bce_out_ref,
                       nlml_acc_ref, bce_acc_ref, *,
                       block_rows, blocks_per_shard, n_rows, binary_targets):
    c = pl.program_id(0)   # shard axis ("parallel" -> split across TCs on v7x)
    i = pl.program_id(1)   # row-tile within shard ("arbitrary" -> carried reduction)

    @pl.when(i == 0)
    def _():
        nlml_acc_ref[...] = jnp.zeros_like(nlml_acc_ref)
        bce_acc_ref[...] = jnp.zeros_like(bce_acc_ref)

    x = x_ref[...].astype(jnp.float32)
    y = y_ref[...].astype(jnp.float32)

    # Row-validity mask: handles the partial last tile and phantom tiles created
    # by rounding num_blocks up to the shard split.
    block_idx = c * blocks_per_shard + i
    row_ids = block_idx * block_rows + jax.lax.broadcasted_iota(
        jnp.int32, (block_rows, 1), 0)
    row_valid = row_ids < n_rows                      # (block_rows, 1)

    # ---- NLML partial: per-row logsumexp difference (sublane-resident acc) ----
    if binary_targets:
        # exact for y in {0, 1}: x + log(y) == where(y > 0, x, -inf); saves one
        # EUP log per element.
        gold_logits = jnp.where(y > 0, x, -jnp.inf)
    else:
        gold_logits = x + jnp.log(y)
    gold = _row_logsumexp(gold_logits)
    full = _row_logsumexp(x)
    nlml_acc_ref[...] += jnp.where(row_valid, full - gold, 0.0)

    # ---- BCE-with-logits partial on clamp(x, -50, 50) (lane-resident acc) ----
    xc = jnp.clip(x, -50.0, 50.0)
    bce_elem = jnp.maximum(xc, 0.0) - xc * y + jnp.log1p(jnp.exp(-jnp.abs(xc)))
    bce_elem = jnp.where(row_valid, bce_elem, 0.0)
    bce_acc_ref[...] += jnp.sum(bce_elem, axis=0, keepdims=True)

    # Single full cross-lane reduce per shard; written lane-dense (1, 128).
    @pl.when(i == pl.num_programs(1) - 1)
    def _():
        nlml_out_ref[...] = jnp.full((1, 128), jnp.sum(nlml_acc_ref[...]), jnp.float32)
        bce_out_ref[...] = jnp.full((1, 128), jnp.sum(bce_acc_ref[...]), jnp.float32)


def _choose_block_rows(n_rows, n_cols, x_bytes, y_bytes,
                       vmem_budget_bytes=24 * 1024 * 1024):
    """Largest row tile (multiple of 8, or full N) whose pipelined input buffers
    plus the per-row NLML scratch fit in vmem_budget_bytes."""
    # per-row cost: 2 pipeline buffers for each input + (block_rows, 1) f32
    # scratch padded to 128 lanes.
    bytes_per_row = 2 * n_cols * (x_bytes + y_bytes) + 128 * 4
    if n_rows * bytes_per_row <= vmem_budget_bytes:
        return n_rows                               # block == full dim is always legal
    rows = (vmem_budget_bytes // bytes_per_row) // 8 * 8
    rows = max(rows, 8)
    if n_rows >= 8:
        rows = min(rows, (n_rows // 8) * 8)
    else:
        rows = n_rows
    return rows


def coref_loss(input_, target, bce_weight=0.5, *, block_rows=None,
               num_shards=2, binary_targets=True):
    """Pallas TPU implementation of CorefLoss.forward.

    binary_targets=True assumes target values are in {0, 1} (true for this
    coref model); set False to keep the exact x + log(target) formulation for
    soft targets.
    """
    assert input_.shape == target.shape and input_.ndim == 2
    n_rows, n_cols = input_.shape

    if block_rows is None:
        block_rows = _choose_block_rows(
            n_rows, n_cols, jnp.dtype(input_.dtype).itemsize,
            jnp.dtype(target.dtype).itemsize)
    assert block_rows == n_rows or (block_rows % 8 == 0 and block_rows <= n_rows), (
        "block_rows must be a multiple of 8 or equal to n_rows")

    num_blocks = pl.cdiv(n_rows, block_rows)
    num_shards = max(1, min(num_shards, num_blocks))
    blocks_per_shard = pl.cdiv(num_blocks, num_shards)

    def row_block_map(c, i):
        b = c * blocks_per_shard + i
        return (jnp.minimum(b, num_blocks - 1), 0)   # clamp phantom tail tiles

    kernel = functools.partial(
        _coref_loss_kernel,
        block_rows=block_rows,
        blocks_per_shard=blocks_per_shard,
        n_rows=n_rows,
        binary_targets=binary_targets,
    )

    nlml_parts, bce_parts = pl.pallas_call(
        kernel,
        out_shape=(
            jax.ShapeDtypeStruct((num_shards, 128), jnp.float32),
            jax.ShapeDtypeStruct((num_shards, 128), jnp.float32),
        ),
        grid_spec=pltpu.PrefetchScalarGridSpec(
            num_scalar_prefetch=0,
            grid=(num_shards, blocks_per_shard),
            in_specs=[
                pl.BlockSpec((block_rows, n_cols), row_block_map),
                pl.BlockSpec((block_rows, n_cols), row_block_map),
            ],
            out_specs=[
                pl.BlockSpec((1, 128), lambda c, i: (c, 0)),
                pl.BlockSpec((1, 128), lambda c, i: (c, 0)),
            ],
            scratch_shapes=[
                pltpu.VMEM((block_rows, 1), jnp.float32),   # per-row NLML partials
                pltpu.VMEM((1, n_cols), jnp.float32),       # per-column BCE partials
            ],
        ),
        compiler_params=pltpu.CompilerParams(
            dimension_semantics=("parallel", "arbitrary"),
            vmem_limit_bytes=32 * 1024 * 1024,
        ),
    )(input_, target)

    # Tiny final combine (num_shards values) in plain JAX.
    nlml = jnp.sum(nlml_parts[:, 0]) / n_rows
    bce = jnp.sum(bce_parts[:, 0]) / (n_rows * n_cols)
    return nlml + bce * jnp.float32(bce_weight)


def coref_loss_ref(input_, target, bce_weight=0.5):
    """Pure-JAX reference matching the PyTorch module."""
    gold = jax.scipy.special.logsumexp(input_ + jnp.log(target), axis=1)
    full = jax.scipy.special.logsumexp(input_, axis=1)
    nlml = jnp.mean(full - gold)
    x = jnp.clip(input_, -50.0, 50.0)
    bce = jnp.mean(jnp.maximum(x, 0.0) - x * target + jnp.log1p(jnp.exp(-jnp.abs(x))))
    return nlml + bce * bce_weight


if __name__ == "__main__":
    key = jax.random.PRNGKey(0)
    k1, k2 = jax.random.split(key)

    N, C = 150, 128          # small [words, candidate-antecedents] score matrix
    BCE_WEIGHT = 0.5         # module __init__ arg, 0 <= w <= 1

    input_ = jax.random.normal(k1, (N, C), dtype=jnp.float32) * 3.0
    # binary coref targets; guarantee at least one positive per row (dummy antecedent)
    target = (jax.random.uniform(k2, (N, C)) < 0.1).astype(jnp.float32)
    target = target.at[:, 0].set(1.0)

    ref = jax.block_until_ready(coref_loss_ref(input_, target, BCE_WEIGHT))

    # Default config: at this small size it is a single full-array tile.
    loss = jax.block_until_ready(coref_loss(input_, target, BCE_WEIGHT))
    assert jnp.allclose(loss, ref, rtol=1e-5, atol=1e-5), (loss, ref)

    # Forced small tiles: exercises multi-tile carried reduction, the 2-shard
    # (megacore) split, phantom-tile clamping and tail-row masking.
    loss_tiled = jax.block_until_ready(
        coref_loss(input_, target, BCE_WEIGHT, block_rows=64, num_shards=2))
    assert jnp.allclose(loss_tiled, ref, rtol=1e-5, atol=1e-5), (loss_tiled, ref)

    # General (non-binary-target) path also exercised for completeness.
    loss_soft = jax.block_until_ready(
        coref_loss(input_, target, BCE_WEIGHT, binary_targets=False))
    assert jnp.allclose(loss_soft, ref, rtol=1e-5, atol=1e-5), (loss_soft, ref)

    print("KERNEL_OK")
</pallas_src>

<mosaic_0001>
module attributes {stable_mosaic.version = 11 : i64} {
  func.func @_coref_loss_kernel(%arg0: i32, %arg1: i32, %arg2: memref<150x128xf32, #tpu.memory_space<vmem>>, %arg3: memref<150x128xf32, #tpu.memory_space<vmem>>, %arg4: memref<1x128xf32, #tpu.memory_space<vmem>>, %arg5: memref<1x128xf32, #tpu.memory_space<vmem>>, %arg6: memref<150x1xf32, #tpu.memory_space<vmem>>, %arg7: memref<1x128xf32, #tpu.memory_space<vmem>>) attributes {dimension_semantics = [#tpu.dimension_semantics<parallel>, #tpu.dimension_semantics<arbitrary>], iteration_bounds = array<i64: 1, 1>, scalar_prefetch = 0 : i64, scratch_operands = 2 : i64, tpu.core_type = #tpu.core_type<tc>, window_params = [{transform_indices = @transform_0, window_bounds = array<i64: 150, 128>}, {transform_indices = @transform_1, window_bounds = array<i64: 150, 128>}, {transform_indices = @transform_2, window_bounds = array<i64: 1, 128>}, {transform_indices = @transform_3, window_bounds = array<i64: 1, 128>}]} {
    %c0_i32 = arith.constant 0 : i32
    %0 = arith.cmpi eq, %arg1, %c0_i32 : i32
    %1 = arith.extui %0 : i1 to i32
    %c0_i32_0 = arith.constant 0 : i32
    %2 = arith.cmpi ne, %1, %c0_i32_0 : i32
    scf.if %2 {
      %cst_31 = arith.constant 0.000000e+00 : f32
      %77 = vector.broadcast %cst_31 : f32 to vector<150x1xf32>
      %c0_32 = arith.constant 0 : index
      %c0_33 = arith.constant 0 : index
      %78 = vector.load %arg6[%c0_32, %c0_33] : memref<150x1xf32, #tpu.memory_space<vmem>>, vector<150x1xf32>
      tpu.vector_store %arg6[%c0_32, %c0_33], %77 {strides = array<i32>} : memref<150x1xf32, #tpu.memory_space<vmem>>, vector<150x1xf32>,
      %cst_34 = arith.constant 0.000000e+00 : f32
      %79 = vector.broadcast %cst_34 : f32 to vector<1x128xf32>
      %c0_35 = arith.constant 0 : index
      %c0_36 = arith.constant 0 : index
      %80 = vector.load %arg7[%c0_35, %c0_36] : memref<1x128xf32, #tpu.memory_space<vmem>>, vector<1x128xf32>
      tpu.vector_store %arg7[%c0_35, %c0_36], %79 {strides = array<i32>} : memref<1x128xf32, #tpu.memory_space<vmem>>, vector<1x128xf32>,
    } else {
    }
    %c0 = arith.constant 0 : index
    %c0_1 = arith.constant 0 : index
    %3 = vector.load %arg2[%c0, %c0_1] : memref<150x128xf32, #tpu.memory_space<vmem>>, vector<150x128xf32>
    %c0_2 = arith.constant 0 : index
    %c0_3 = arith.constant 0 : index
    %4 = vector.load %arg3[%c0_2, %c0_3] : memref<150x128xf32, #tpu.memory_space<vmem>>, vector<150x128xf32>
    %c1_i32 = arith.constant 1 : i32
    %5 = arith.muli %arg0, %c1_i32 : i32
    %6 = arith.addi %5, %arg1 : i32
    %c150_i32 = arith.constant 150 : i32
    %7 = arith.muli %6, %c150_i32 : i32
    %8 = tpu.iota {dimensions = array<i32: 0>} : vector<150x1xi32>
    %9 = vector.broadcast %7 : i32 to vector<150x1xi32>
    %10 = arith.addi %9, %8 : vector<150x1xi32>
    %c150_i32_4 = arith.constant 150 : i32
    %11 = vector.broadcast %c150_i32_4 : i32 to vector<150x1xi32>
    %12 = arith.cmpi slt, %10, %11 : vector<150x1xi32>
    %cst = arith.constant 0.000000e+00 : f32
    %13 = vector.broadcast %cst : f32 to vector<150x128xf32>
    %14 = arith.cmpf ogt, %4, %13 : vector<150x128xf32>
    %cst_5 = arith.constant 0xFF800000 : f32
    %15 = vector.broadcast %cst_5 : f32 to vector<150x128xf32>
    %16 = arith.select %14, %3, %15 : vector<150x128xi1>, vector<150x128xf32>
    %cst_6 = arith.constant dense<0xFF800000> : vector<150xf32>
    %17 = vector.multi_reduction <maximumf>, %16, %cst_6 [1] : vector<150x128xf32> to vector<150xf32>
    %18 = vector.shape_cast %17 : vector<150xf32> to vector<150x1xf32>
    %cst_7 = arith.constant 0xFF800000 : f32
    %19 = vector.broadcast %cst_7 : f32 to vector<150x1xf32>
    %20 = arith.cmpf ogt, %18, %19 : vector<150x1xf32>
    %cst_8 = arith.constant 0.000000e+00 : f32
    %21 = vector.broadcast %cst_8 : f32 to vector<150x1xf32>
    %22 = arith.select %20, %18, %21 : vector<150x1xi1>, vector<150x1xf32>
    %23 = vector.broadcast %22 : vector<150x1xf32> to vector<150x128xf32>
    %24 = arith.subf %16, %23 : vector<150x128xf32>
    %25 = math.exp %24 : vector<150x128xf32>
    %cst_9 = arith.constant dense<0.000000e+00> : vector<150xf32>
    %26 = vector.multi_reduction <add>, %25, %cst_9 [1] : vector<150x128xf32> to vector<150xf32>
    %27 = vector.shape_cast %26 : vector<150xf32> to vector<150x1xf32>
    %28 = math.log %27 : vector<150x1xf32>
    %29 = arith.addf %22, %28 : vector<150x1xf32>
    %30 = arith.select %20, %29, %18 : vector<150x1xi1>, vector<150x1xf32>
    %cst_10 = arith.constant dense<0xFF800000> : vector<150xf32>
    %31 = vector.multi_reduction <maximumf>, %3, %cst_10 [1] : vector<150x128xf32> to vector<150xf32>
    %32 = vector.shape_cast %31 : vector<150xf32> to vector<150x1xf32>
    %cst_11 = arith.constant 0xFF800000 : f32
    %33 = vector.broadcast %cst_11 : f32 to vector<150x1xf32>
    %34 = arith.cmpf ogt, %32, %33 : vector<150x1xf32>
    %cst_12 = arith.constant 0.000000e+00 : f32
    %35 = vector.broadcast %cst_12 : f32 to vector<150x1xf32>
    %36 = arith.select %34, %32, %35 : vector<150x1xi1>, vector<150x1xf32>
    %37 = vector.broadcast %36 : vector<150x1xf32> to vector<150x128xf32>
    %38 = arith.subf %3, %37 : vector<150x128xf32>
    %39 = math.exp %38 : vector<150x128xf32>
    %cst_13 = arith.constant dense<0.000000e+00> : vector<150xf32>
    %40 = vector.multi_reduction <add>, %39, %cst_13 [1] : vector<150x128xf32> to vector<150xf32>
    %41 = vector.shape_cast %40 : vector<150xf32> to vector<150x1xf32>
    %42 = math.log %41 : vector<150x1xf32>
    %43 = arith.addf %36, %42 : vector<150x1xf32>
    %44 = arith.select %34, %43, %32 : vector<150x1xi1>, vector<150x1xf32>
    %c0_14 = arith.constant 0 : index
    %c0_15 = arith.constant 0 : index
    %45 = vector.load %arg6[%c0_14, %c0_15] : memref<150x1xf32, #tpu.memory_space<vmem>>, vector<150x1xf32>
    %46 = arith.subf %44, %30 : vector<150x1xf32>
    %cst_16 = arith.constant 0.000000e+00 : f32
    %47 = vector.broadcast %cst_16 : f32 to vector<150x1xf32>
    %48 = arith.select %12, %46, %47 : vector<150x1xi1>, vector<150x1xf32>
    %49 = arith.addf %45, %48 : vector<150x1xf32>
    %c0_17 = arith.constant 0 : index
    %c0_18 = arith.constant 0 : index
    %50 = vector.load %arg6[%c0_17, %c0_18] : memref<150x1xf32, #tpu.memory_space<vmem>>, vector<150x1xf32>
    tpu.vector_store %arg6[%c0_17, %c0_18], %49 {strides = array<i32>} : memref<150x1xf32, #tpu.memory_space<vmem>>, vector<150x1xf32>,
    %cst_19 = arith.constant -5.000000e+01 : f32
    %cst_20 = arith.constant 5.000000e+01 : f32
    %51 = vector.broadcast %cst_19 : f32 to vector<150x128xf32>
    %52 = arith.maximumf %51, %3 : vector<150x128xf32>
    %53 = vector.broadcast %cst_20 : f32 to vector<150x128xf32>
    %54 = arith.minimumf %53, %52 : vector<150x128xf32>
    %cst_21 = arith.constant 0.000000e+00 : f32
    %55 = vector.broadcast %cst_21 : f32 to vector<150x128xf32>
    %56 = arith.maximumf %54, %55 : vector<150x128xf32>
    %57 = arith.mulf %54, %4 : vector<150x128xf32>
    %58 = arith.subf %56, %57 : vector<150x128xf32>
    %59 = math.absf %54 : vector<150x128xf32>
    %cst_22 = arith.constant 0.000000e+00 : f32
    %60 = vector.broadcast %cst_22 : f32 to vector<150x128xf32>
    %61 = arith.subf %60, %59 : vector<150x128xf32>
    %62 = math.exp %61 : vector<150x128xf32>
    %63 = math.log1p %62 : vector<150x128xf32>
    %64 = arith.addf %58, %63 : vector<150x128xf32>
    %cst_23 = arith.constant 0.000000e+00 : f32
    %65 = vector.shape_cast %12 : vector<150x1xi1> to vector<150x1xi1>
    %66 = vector.broadcast %65 : vector<150x1xi1> to vector<150x128xi1>
    %67 = vector.broadcast %cst_23 : f32 to vector<150x128xf32>
    %68 = arith.select %66, %64, %67 : vector<150x128xi1>, vector<150x128xf32>
    %c0_24 = arith.constant 0 : index
    %c0_25 = arith.constant 0 : index
    %69 = vector.load %arg7[%c0_24, %c0_25] : memref<1x128xf32, #tpu.memory_space<vmem>>, vector<1x128xf32>
    %cst_26 = arith.constant dense<0.000000e+00> : vector<128xf32>
    %70 = vector.multi_reduction <add>, %68, %cst_26 [0] : vector<150x128xf32> to vector<128xf32>
    %71 = vector.shape_cast %70 : vector<128xf32> to vector<1x128xf32>
    %72 = arith.addf %69, %71 : vector<1x128xf32>
    %c0_27 = arith.constant 0 : index
    %c0_28 = arith.constant 0 : index
    %73 = vector.load %arg7[%c0_27, %c0_28] : memref<1x128xf32, #tpu.memory_space<vmem>>, vector<1x128xf32>
    tpu.vector_store %arg7[%c0_27, %c0_28], %72 {strides = array<i32>} : memref<1x128xf32, #tpu.memory_space<vmem>>, vector<1x128xf32>,
    %c0_i32_29 = arith.constant 0 : i32
    %74 = arith.cmpi eq, %arg1, %c0_i32_29 : i32
    %75 = arith.extui %74 : i1 to i32
    %c0_i32_30 = arith.constant 0 : i32
    %76 = arith.cmpi ne, %75, %c0_i32_30 : i32
    scf.if %76 {
      %c0_31 = arith.constant 0 : index
      %c0_32 = arith.constant 0 : index
      %77 = vector.load %arg6[%c0_31, %c0_32] : memref<150x1xf32, #tpu.memory_space<vmem>>, vector<150x1xf32>
      %78 = vector.shape_cast %77 : vector<150x1xf32> to vector<1x150x1xf32>
      %cst_33 = arith.constant dense<0.000000e+00> : vector<1xf32>
      %79 = vector.multi_reduction <add>, %78, %cst_33 [1, 2] : vector<1x150x1xf32> to vector<1xf32>
      %80 = vector.shape_cast %79 : vector<1xf32> to vector<1x1x1xf32>
      %81 = vector.extract %80[0, 0, 0] : f32 from vector<1x1x1xf32>
      %82 = vector.broadcast %81 : f32 to vector<1x128xf32>
      %c0_34 = arith.constant 0 : index
      %c0_35 = arith.constant 0 : index
      %83 = vector.load %arg4[%c0_34, %c0_35] : memref<1x128xf32, #tpu.memory_space<vmem>>, vector<1x128xf32>
      tpu.vector_store %arg4[%c0_34, %c0_35], %82 {strides = array<i32>} : memref<1x128xf32, #tpu.memory_space<vmem>>, vector<1x128xf32>,
      %c0_36 = arith.constant 0 : index
      %c0_37 = arith.constant 0 : index
      %84 = vector.load %arg7[%c0_36, %c0_37] : memref<1x128xf32, #tpu.memory_space<vmem>>, vector<1x128xf32>
      %85 = vector.shape_cast %84 : vector<1x128xf32> to vector<1x1x128xf32>
      %cst_38 = arith.constant dense<0.000000e+00> : vector<1xf32>
      %86 = vector.multi_reduction <add>, %85, %cst_38 [1, 2] : vector<1x1x128xf32> to vector<1xf32>
      %87 = vector.shape_cast %86 : vector<1xf32> to vector<1x1x1xf32>
      %88 = vector.extract %87[0, 0, 0] : f32 from vector<1x1x1xf32>
      %89 = vector.broadcast %88 : f32 to vector<1x128xf32>
      %c0_39 = arith.constant 0 : index
      %c0_40 = arith.constant 0 : index
      %90 = vector.load %arg5[%c0_39, %c0_40] : memref<1x128xf32, #tpu.memory_space<vmem>>, vector<1x128xf32>
      tpu.vector_store %arg5[%c0_39, %c0_40], %89 {strides = array<i32>} : memref<1x128xf32, #tpu.memory_space<vmem>>, vector<1x128xf32>,
    } else {
    }
    return
  }
  func.func @transform_0(%arg0: i32, %arg1: i32) -> (i32, i32) {
    %c1_i32 = arith.constant 1 : i32
    %0 = arith.muli %arg0, %c1_i32 : i32
    %1 = arith.addi %0, %arg1 : i32
    %c0_i32 = arith.constant 0 : i32
    %2 = arith.minsi %1, %c0_i32 : i32
    %c0_i32_0 = arith.constant 0 : i32
    %c0_i32_1 = arith.constant 0 : i32
    return %2, %c0_i32_0 : i32, i32
  }
  func.func @transform_1(%arg0: i32, %arg1: i32) -> (i32, i32) {
    %c1_i32 = arith.constant 1 : i32
    %0 = arith.muli %arg0, %c1_i32 : i32
    %1 = arith.addi %0, %arg1 : i32
    %c0_i32 = arith.constant 0 : i32
    %2 = arith.minsi %1, %c0_i32 : i32
    %c0_i32_0 = arith.constant 0 : i32
    %c0_i32_1 = arith.constant 0 : i32
    return %2, %c0_i32_0 : i32, i32
  }
  func.func @transform_2(%arg0: i32, %arg1: i32) -> (i32, i32) {
    %c0_i32 = arith.constant 0 : i32
    %c0_i32_0 = arith.constant 0 : i32
    return %arg0, %c0_i32 : i32, i32
  }
  func.func @transform_3(%arg0: i32, %arg1: i32) -> (i32, i32) {
    %c0_i32 = arith.constant 0 : i32
    %c0_i32_0 = arith.constant 0 : i32
    return %arg0, %c0_i32 : i32, i32
  }
}

</mosaic_0001>

<llo_original>
// kernel: tpu_custom_call.1
$region0: #{tpu_custom_call.1}
  #allocation0 [shape = 'u32[]', space=smem, size = 0x4, offset = 0x4, fixed_abs, tag = 'smem constant byte address 0x4 - core index']
  #allocation1 [shape = 'u32[72,128]{1,0:T(1,128)}', space=vmem, size = 0x9000, scoped, tag = 'internal scratch']
  #allocation2 [shape = 'f32[150,1]{1,0:T(8,128)}', space=vmem, size = 0x13000, scoped, tag = 'scratch operand']
  #allocation3 [shape = 'f32[1,128]{1,0:T(1,128)}', space=vmem, size = 0x200, scoped, tag = 'scratch operand']
  %s0 = inlined_call_operand.hbm [shape: f32[150,128], index: 0, kind: input, shape index: {}]
  %s1 = inlined_call_operand.hbm [shape: f32[150,128], index: 1, kind: input, shape index: {}]
  %s2 = inlined_call_operand.hbm [shape: f32[1,128], index: 2, kind: output, shape index: {0}]
  %s3 = inlined_call_operand.hbm [shape: f32[1,128], index: 3, kind: output, shape index: {1}]
  %4 = xla_tuple %s2, %s3
  %s5 = sld [smem:[#allocation0]]
  $region42: #{tpu_custom_call.1} parent=0
    _
  %s7 = ssub.s32 1, %s5
  %s8 = scalar_select 0, %s7, %s5
  $region1: #{tpu_custom_call.1} parent=0
    #allocation4 [shape = 'u8[77824]{0}', space=vmem, size = 0x13000, scoped, tag = 'input window, operand 0, single buffered']
    #allocation5 [shape = 's32[1]{0}', space=sflag, size = 0x4, scoped, tag = 'scoped memory for tpu_custom_call.1']
    #allocation6 [shape = 's32[1]{0}', space=sflag, size = 0x4, scoped, tag = 'scoped memory for tpu_custom_call.1']
    #allocation7 [shape = 'u8[77824]{0}', space=vmem, size = 0x13000, scoped, tag = 'input window, operand 1, single buffered']
    #allocation8 [shape = 's32[1]{0}', space=sflag, size = 0x4, scoped, tag = 'scoped memory for tpu_custom_call.1']
    #allocation9 [shape = 'u8[512]{0}', space=vmem, size = 0x400, scoped, tag = 'output window, operand 0, single buffered']
    #allocation10 [shape = 'u8[512]{0}', space=vmem, size = 0x400, scoped, tag = 'output window, operand 1, single buffered']
    #allocation11 [shape = 's32[1]{0}', space=sflag, size = 0x4, scoped, tag = 'scoped memory for tpu_custom_call.1']
    %9 = vsyncpa [#allocation5], 0
    %10 = vsyncpa [#allocation8], 0
    %11 = vsyncpa [#allocation6], 0
    %12 = vsyncpa [#allocation11], 0
    // Predicated region
    $region2: #{tpu_custom_call.1} parent=1 // pred_check
      _
    $region3: #{tpu_custom_call.1} parent=1 // pred_check_branch
      %14 = sbr.rel (0) target = $region5
    $region4: #{tpu_custom_call.1} parent=1 // pred_region
      %s15 = sadd.s32 0, 0
      %p16 = scmp.lt.s32.totalorder %s15, 0
      %s17 = scalar_select %p16, %s15, 0
      %s18 = smul.u32 19, %s17
      %20 = vsyncadd [#allocation5], 0
      %s21 = smul.addr %s18, 8
      %s22 = scalar_lea.hbm %s0, %s21
      %s23 = sshll.u32 %s22, 4
      %s24 = int_to_ptr.hbm [resolvable:$true] %s23
      %s25 = sshll.u32 [#allocation4], 4
      %s26 = int_to_ptr.vmem [resolvable:$true] %s25
      %31 = dma.hbm_to_vmem [thread:$0]  %s24, 2432, %s26, [#allocation5], 128, 128, 8
    $region5: #{tpu_custom_call.1} parent=1 // pred_fallthru
      _
    // Predicated region
    $region6: #{tpu_custom_call.1} parent=1 // pred_check
      _
    $region7: #{tpu_custom_call.1} parent=1 // pred_check_branch
      %33 = sbr.rel (0) target = $region9
    $region8: #{tpu_custom_call.1} parent=1 // pred_region
      %s34 = sadd.s32 0, 0
      %p35 = scmp.lt.s32.totalorder %s34, 0
      %s36 = scalar_select %p35, %s34, 0
      %s37 = smul.u32 19, %s36
      %39 = vsyncadd [#allocation8], 0
      %s40 = smul.addr %s37, 8
      %s41 = scalar_lea.hbm %s1, %s40
      %s42 = sshll.u32 %s41, 4
      %s43 = int_to_ptr.hbm [resolvable:$true] %s42
      %s44 = sshll.u32 [#allocation7], 4
      %s45 = int_to_ptr.vmem [resolvable:$true] %s44
      %50 = dma.hbm_to_vmem [thread:$0]  %s43, 2432, %s45, [#allocation8], 128, 128, 8
    $region9: #{tpu_custom_call.1} parent=1 // pred_fallthru
      _
    // Predicated region
    $region10: #{tpu_custom_call.1} parent=1 // pred_check
      _
    $region11: #{tpu_custom_call.1} parent=1 // pred_check_branch
      %52 = sbr.rel (0) target = $region13
    $region12: #{tpu_custom_call.1} parent=1 // pred_region
      %54 = dma.done [#allocation5], 2432
    $region13: #{tpu_custom_call.1} parent=1 // pred_fallthru
      _
    // Predicated region
    $region14: #{tpu_custom_call.1} parent=1 // pred_check
      _
    $region15: #{tpu_custom_call.1} parent=1 // pred_check_branch
      %56 = sbr.rel (0) target = $region17
    $region16: #{tpu_custom_call.1} parent=1 // pred_region
      %58 = dma.done [#allocation8], 2432
    $region17: #{tpu_custom_call.1} parent=1 // pred_fallthru
      _
    %s59 = sadd.s32 0, 0
    %p60 = scmp.lt.s32.totalorder %s59, 0
    %s61 = scalar_select %p60, %s59, 0
    %s62 = smul.u32 19, %s61
    %s63 = sadd.s32 0, 0
    %p64 = scmp.lt.s32.totalorder %s63, 0
    %s65 = scalar_select %p64, %s63, 0
    %s66 = smul.u32 19, %s65
    %p67 = scmp.eq.s32.totalorder 0, 0
    // Predicated region
    $region18: #{tpu_custom_call.1} parent=1 // pred_check
      %p68 = pneg %p67
    $region19: #{tpu_custom_call.1} parent=1 // pred_check_branch
      %70 = sbr.rel (%p68) target = $region21
    $region20: #{tpu_custom_call.1} parent=1 // pred_region
      %vm71 = vcmask 7168
      %72 = vst.msk [vmem:[#allocation2] sm:$0xff] %vm71, 0.0
      %73 = vst.msk [vmem:[#allocation2 + $0x8] sm:$0xff] %vm71, 0.0
      %74 = vst.msk [vmem:[#allocation2 + $0x10] sm:$0xff] %vm71, 0.0
      %75 = vst.msk [vmem:[#allocation2 + $0x18] sm:$0xff] %vm71, 0.0
      %76 = vst.msk [vmem:[#allocation2 + $0x20] sm:$0xff] %vm71, 0.0
      %77 = vst.msk [vmem:[#allocation2 + $0x28] sm:$0xff] %vm71, 0.0
      %78 = vst.msk [vmem:[#allocation2 + $0x30] sm:$0xff] %vm71, 0.0
      %79 = vst.msk [vmem:[#allocation2 + $0x38] sm:$0xff] %vm71, 0.0
      %80 = vst.msk [vmem:[#allocation2 + $0x40] sm:$0xff] %vm71, 0.0
      %81 = vst.msk [vmem:[#allocation2 + $0x48] sm:$0xff] %vm71, 0.0
      %82 = vst.msk [vmem:[#allocation2 + $0x50] sm:$0xff] %vm71, 0.0
      %83 = vst.msk [vmem:[#allocation2 + $0x58] sm:$0xff] %vm71, 0.0
      %84 = vst.msk [vmem:[#allocation2 + $0x60] sm:$0xff] %vm71, 0.0
      %85 = vst.msk [vmem:[#allocation2 + $0x68] sm:$0xff] %vm71, 0.0
      %86 = vst.msk [vmem:[#allocation2 + $0x70] sm:$0xff] %vm71, 0.0
      %87 = vst.msk [vmem:[#allocation2 + $0x78] sm:$0xff] %vm71, 0.0
      %88 = vst.msk [vmem:[#allocation2 + $0x80] sm:$0xff] %vm71, 0.0
      %89 = vst.msk [vmem:[#allocation2 + $0x88] sm:$0xff] %vm71, 0.0
      %vm90 = vcmask 5120
      %91 = vst.msk [vmem:[#allocation2 + $0x90] sm:$0x3f] %vm90, 0.0
      %92 = vst [vmem:[#allocation3] sm:$0x1] 0.0
    $region21: #{tpu_custom_call.1} parent=1 // pred_fallthru
      _
    %v93 = vld [vmem:[#allocation4] sm:$0xff]
    %v94 = vld [vmem:[#allocation4 + $0x8] sm:$0xff]
    %v95 = vld [vmem:[#allocation4 + $0x10] sm:$0xff]
    %v96 = vld [vmem:[#allocation4 + $0x18] sm:$0xff]
    %v97 = vld [vmem:[#allocation4 + $0x20] sm:$0xff]
    %v98 = vld [vmem:[#allocation4 + $0x28] sm:$0xff]
    %v99 = vld [vmem:[#allocation4 + $0x30] sm:$0xff]
    %v100 = vld [vmem:[#allocation4 + $0x38] sm:$0xff]
    %v101 = vld [vmem:[#allocation4 + $0x40] sm:$0xff]
    %v102 = vld [vmem:[#allocation4 + $0x48] sm:$0xff]
    %v103 = vld [vmem:[#allocation4 + $0x50] sm:$0xff]
    %v104 = vld [vmem:[#allocation4 + $0x58] sm:$0xff]
    %v105 = vld [vmem:[#allocation4 + $0x60] sm:$0xff]
    %v106 = vld [vmem:[#allocation4 + $0x68] sm:$0xff]
    %v107 = vld [vmem:[#allocation4 + $0x70] sm:$0xff]
    %v108 = vld [vmem:[#allocation4 + $0x78] sm:$0xff]
    %v109 = vld [vmem:[#allocation4 + $0x80] sm:$0xff]
    %v110 = vld [vmem:[#allocation4 + $0x88] sm:$0xff]
    %v111 = vld [vmem:[#allocation4 + $0x90] sm:$0x3f]
    %v112 = vld [vmem:[#allocation7] sm:$0xff]
    %v113 = vld [vmem:[#allocation7 + $0x8] sm:$0xff]
    %v114 = vld [vmem:[#allocation7 + $0x10] sm:$0xff]
    %v115 = vld [vmem:[#allocation7 + $0x18] sm:$0xff]
    %v116 = vld [vmem:[#allocation7 + $0x20] sm:$0xff]
    %v117 = vld [vmem:[#allocation7 + $0x28] sm:$0xff]
    %v118 = vld [vmem:[#allocation7 + $0x30] sm:$0xff]
    %v119 = vld [vmem:[#allocation7 + $0x38] sm:$0xff]
    %v120 = vld [vmem:[#allocation7 + $0x40] sm:$0xff]
    %v121 = vld [vmem:[#allocation7 + $0x48] sm:$0xff]
    %v122 = vld [vmem:[#allocation7 + $0x50] sm:$0xff]
    %v123 = vld [vmem:[#allocation7 + $0x58] sm:$0xff]
    %v124 = vld [vmem:[#allocation7 + $0x60] sm:$0xff]
    %v125 = vld [vmem:[#allocation7 + $0x68] sm:$0xff]
    %v126 = vld [vmem:[#allocation7 + $0x70] sm:$0xff]
    %v127 = vld [vmem:[#allocation7 + $0x78] sm:$0xff]
    %v128 = vld [vmem:[#allocation7 + $0x80] sm:$0xff]
    %v129 = vld [vmem:[#allocation7 + $0x88] sm:$0xff]
    %v130 = vld [vmem:[#allocation7 + $0x90] sm:$0x3f]
    %s131 = sadd.s32 0, 0
    %s132 = smul.u32 %s131, 150
    %v133 = vlaneseq
    %v134 = vshrl.u32 %v133, 7
    %v135 = vadd.s32 %v134, 8
    %v136 = vadd.s32 %v134, 16
    %v137 = vadd.s32 %v134, 24
    %v138 = vadd.s32 %v134, 32
    %v139 = vadd.s32 %v134, 40
    %v140 = vadd.s32 %v134, 48
    %v141 = vadd.s32 %v134, 56
    %v142 = vadd.s32 %v134, 64
    %v143 = vadd.s32 %v134, 72
    %v144 = vadd.s32 %v134, 80
    %v145 = vadd.s32 %v134, 88
    %v146 = vadd.s32 %v134, 96
    %v147 = vadd.s32 %v134, 104
    %v148 = vadd.s32 %v134, 112
    %v149 = vadd.s32 %v134, 120
    %v150 = vadd.s32 %v134, 128
    %v151 = vadd.s32 %v134, 136
    %v152 = vadd.s32 %v134, 144
    %v153 = vstv %s132
    %v154 = vadd.s32 %v153, %v134
    %v155 = vadd.s32 %v153, %v135
    %v156 = vadd.s32 %v153, %v136
    %v157 = vadd.s32 %v153, %v137
    %v158 = vadd.s32 %v153, %v138
    %v159 = vadd.s32 %v153, %v139
    %v160 = vadd.s32 %v153, %v140
    %v161 = vadd.s32 %v153, %v141
    %v162 = vadd.s32 %v153, %v142
    %v163 = vadd.s32 %v153, %v143
    %v164 = vadd.s32 %v153, %v144
    %v165 = vadd.s32 %v153, %v145
    %v166 = vadd.s32 %v153, %v146
    %v167 = vadd.s32 %v153, %v147
    %v168 = vadd.s32 %v153, %v148
    %v169 = vadd.s32 %v153, %v149
    %v170 = vadd.s32 %v153, %v150
    %v171 = vadd.s32 %v153, %v151
    %v172 = vadd.s32 %v153, %v152
    %vm173 = vcmp.lt.s32.totalorder %v154, 150
    %vm174 = vcmp.lt.s32.totalorder %v155, 150
    %vm175 = vcmp.lt.s32.totalorder %v156, 150
    %vm176 = vcmp.lt.s32.totalorder %v157, 150
    %vm177 = vcmp.lt.s32.totalorder %v158, 150
    %vm178 = vcmp.lt.s32.totalorder %v159, 150
    %vm179 = vcmp.lt.s32.totalorder %v160, 150
    %vm180 = vcmp.lt.s32.totalorder %v161, 150
    %vm181 = vcmp.lt.s32.totalorder %v162, 150
    %vm182 = vcmp.lt.s32.totalorder %v163, 150
    %vm183 = vcmp.lt.s32.totalorder %v164, 150
    %vm184 = vcmp.lt.s32.totalorder %v165, 150
    %vm185 = vcmp.lt.s32.totalorder %v166, 150
    %vm186 = vcmp.lt.s32.totalorder %v167, 150
    %vm187 = vcmp.lt.s32.totalorder %v168, 150
    %vm188 = vcmp.lt.s32.totalorder %v169, 150
    %vm189 = vcmp.lt.s32.totalorder %v170, 150
    %vm190 = vcmp.lt.s32.totalorder %v171, 150
    %vm191 = vcmp.lt.s32.totalorder %v172, 150
    %vm192 = vcmp.gt.f32.partialorder %v112, 0.0
    %vm193 = vcmp.gt.f32.partialorder %v113, 0.0
    %vm194 = vcmp.gt.f32.partialorder %v114, 0.0
    %vm195 = vcmp.gt.f32.partialorder %v115, 0.0
    %vm196 = vcmp.gt.f32.partialorder %v116, 0.0
    %vm197 = vcmp.gt.f32.partialorder %v117, 0.0
    %vm198 = vcmp.gt.f32.partialorder %v118, 0.0
    %vm199 = vcmp.gt.f32.partialorder %v119, 0.0
    %vm200 = vcmp.gt.f32.partialorder %v120, 0.0
    %vm201 = vcmp.gt.f32.partialorder %v121, 0.0
    %vm202 = vcmp.gt.f32.partialorder %v122, 0.0
    %vm203 = vcmp.gt.f32.partialorder %v123, 0.0
    %vm204 = vcmp.gt.f32.partialorder %v124, 0.0
    %vm205 = vcmp.gt.f32.partialorder %v125, 0.0
    %vm206 = vcmp.gt.f32.partialorder %v126, 0.0
    %vm207 = vcmp.gt.f32.partialorder %v127, 0.0
    %vm208 = vcmp.gt.f32.partialorder %v128, 0.0
    %vm209 = vcmp.gt.f32.partialorder %v129, 0.0
    %vm210 = vcmp.gt.f32.partialorder %v130, 0.0
    %v211 = vsel %vm192, %v93, -inf
    %v212 = vsel %vm193, %v94, -inf
    %v213 = vsel %vm194, %v95, -inf
    %v214 = vsel %vm195, %v96, -inf
    %v215 = vsel %vm196, %v97, -inf
    %v216 = vsel %vm197, %v98, -inf
    %v217 = vsel %vm198, %v99, -inf
    %v218 = vsel %vm199, %v100, -inf
    %v219 = vsel %vm200, %v101, -inf
    %v220 = vsel %vm201, %v102, -inf
    %v221 = vsel %vm202, %v103, -inf
    %v222 = vsel %vm203, %v104, -inf
    %v223 = vsel %vm204, %v105, -inf
    %v224 = vsel %vm205, %v106, -inf
    %v225 = vsel %vm206, %v107, -inf
    %v226 = vsel %vm207, %v108, -inf
    %v227 = vsel %vm208, %v109, -inf
    %v228 = vsel %vm209, %v110, -inf
    %v229 = vsel %vm210, %v111, -inf
    %230 = vmax.xlane.f32.xlu0 %v211
    %v231 = vpop.xlane.xlu0 %230
    %232 = vmax.xlane.f32.xlu0 %v212
    %v233 = vpop.xlane.xlu0 %232
    %234 = vmax.xlane.f32.xlu0 %v213
    %v235 = vpop.xlane.xlu0 %234
    %236 = vmax.xlane.f32.xlu0 %v214
    %v237 = vpop.xlane.xlu0 %236
    %238 = vmax.xlane.f32.xlu0 %v215
    %v239 = vpop.xlane.xlu0 %238
    %240 = vmax.xlane.f32.xlu0 %v216
    %v241 = vpop.xlane.xlu0 %240
    %242 = vmax.xlane.f32.xlu0 %v217
    %v243 = vpop.xlane.xlu0 %242
    %244 = vmax.xlane.f32.xlu0 %v218
    %v245 = vpop.xlane.xlu0 %244
    %246 = vmax.xlane.f32.xlu0 %v219
    %v247 = vpop.xlane.xlu0 %246
    %248 = vmax.xlane.f32.xlu0 %v220
    %v249 = vpop.xlane.xlu0 %248
    %250 = vmax.xlane.f32.xlu0 %v221
    %v251 = vpop.xlane.xlu0 %250
    %252 = vmax.xlane.f32.xlu0 %v222
    %v253 = vpop.xlane.xlu0 %252
    %254 = vmax.xlane.f32.xlu0 %v223
    %v255 = vpop.xlane.xlu0 %254
    %256 = vmax.xlane.f32.xlu0 %v224
    %v257 = vpop.xlane.xlu0 %256
    %258 = vmax.xlane.f32.xlu0 %v225
    %v259 = vpop.xlane.xlu0 %258
    %260 = vmax.xlane.f32.xlu0 %v226
    %v261 = vpop.xlane.xlu0 %260
    %262 = vmax.xlane.f32.xlu0 %v227
    %v263 = vpop.xlane.xlu0 %262
    %264 = vmax.xlane.f32.xlu0 %v228
    %v265 = vpop.xlane.xlu0 %264
    %vm266 = vcmask 1045504
    %v267 = vsel %vm266, %v229, -inf
    %268 = vmax.xlane.f32.xlu0 %v267
    %v269 = vpop.xlane.xlu0 %268
    %vm270 = vcmp.gt.f32.partialorder %v231, -inf
    %vm271 = vcmp.gt.f32.partialorder %v233, -inf
    %vm272 = vcmp.gt.f32.partialorder %v235, -inf
    %vm273 = vcmp.gt.f32.partialorder %v237, -inf
    %vm274 = vcmp.gt.f32.partialorder %v239, -inf
    %vm275 = vcmp.gt.f32.partialorder %v241, -inf
    %vm276 = vcmp.gt.f32.partialorder %v243, -inf
    %vm277 = vcmp.gt.f32.partialorder %v245, -inf
    %vm278 = vcmp.gt.f32.partialorder %v247, -inf
    %vm279 = vcmp.gt.f32.partialorder %v249, -inf
    %vm280 = vcmp.gt.f32.partialorder %v251, -inf
    %vm281 = vcmp.gt.f32.partialorder %v253, -inf
    %vm282 = vcmp.gt.f32.partialorder %v255, -inf
    %vm283 = vcmp.gt.f32.partialorder %v257, -inf
    %vm284 = vcmp.gt.f32.partialorder %v259, -inf
    %vm285 = vcmp.gt.f32.partialorder %v261, -inf
    %vm286 = vcmp.gt.f32.partialorder %v263, -inf
    %vm287 = vcmp.gt.f32.partialorder %v265, -inf
    %vm288 = vcmp.gt.f32.partialorder %v269, -inf
    %v289 = vsel %vm270, %v231, 0.0
    %v290 = vsel %vm271, %v233, 0.0
    %v291 = vsel %vm272, %v235, 0.0
    %v292 = vsel %vm273, %v237, 0.0
    %v293 = vsel %vm274, %v239, 0.0
    %v294 = vsel %vm275, %v241, 0.0
    %v295 = vsel %vm276, %v243, 0.0
    %v296 = vsel %vm277, %v245, 0.0
    %v297 = vsel %vm278, %v247, 0.0
    %v298 = vsel %vm279, %v249, 0.0
    %v299 = vsel %vm280, %v251, 0.0
    %v300 = vsel %vm281, %v253, 0.0
    %v301 = vsel %vm282, %v255, 0.0
    %v302 = vsel %vm283, %v257, 0.0
    %v303 = vsel %vm284, %v259, 0.0
    %v304 = vsel %vm285, %v261, 0.0
    %v305 = vsel %vm286, %v263, 0.0
    %v306 = vsel %vm287, %v265, 0.0
    %v307 = vsel %vm288, %v269, 0.0
    %v308 = vsub.f32 %v211, %v289
    %v309 = vsub.f32 %v212, %v290
    %v310 = vsub.f32 %v213, %v291
    %v311 = vsub.f32 %v214, %v292
    %v312 = vsub.f32 %v215, %v293
    %v313 = vsub.f32 %v216, %v294
    %v314 = vsub.f32 %v217, %v295
    %v315 = vsub.f32 %v218, %v296
    %v316 = vsub.f32 %v219, %v297
    %v317 = vsub.f32 %v220, %v298
    %v318 = vsub.f32 %v221, %v299
    %v319 = vsub.f32 %v222, %v300
    %v320 = vsub.f32 %v223, %v301
    %v321 = vsub.f32 %v224, %v302
    %v322 = vsub.f32 %v225, %v303
    %v323 = vsub.f32 %v226, %v304
    %v324 = vsub.f32 %v227, %v305
    %v325 = vsub.f32 %v228, %v306
    %v326 = vsub.f32 %v229, %v307
    %v327 = vmul.f32 %v308, 1.442695
    %v328 = vpow.pop %v327
    %v329 = vmul.f32 %v309, 1.442695
    %v330 = vpow.pop %v329
    %v331 = vmul.f32 %v310, 1.442695
    %v332 = vpow.pop %v331
    %v333 = vmul.f32 %v311, 1.442695
    %v334 = vpow.pop %v333
    %v335 = vmul.f32 %v312, 1.442695
    %v336 = vpow.pop %v335
    %v337 = vmul.f32 %v313, 1.442695
    %v338 = vpow.pop %v337
    %v339 = vmul.f32 %v314, 1.442695
    %v340 = vpow.pop %v339
    %v341 = vmul.f32 %v315, 1.442695
    %v342 = vpow.pop %v341
    %v343 = vmul.f32 %v316, 1.442695
    %v344 = vpow.pop %v343
    %v345 = vmul.f32 %v317, 1.442695
    %v346 = vpow.pop %v345
    %v347 = vmul.f32 %v318, 1.442695
    %v348 = vpow.pop %v347
    %v349 = vmul.f32 %v319, 1.442695
    %v350 = vpow.pop %v349
    %v351 = vmul.f32 %v320, 1.442695
    %v352 = vpow.pop %v351
    %v353 = vmul.f32 %v321, 1.442695
    %v354 = vpow.pop %v353
    %v355 = vmul.f32 %v322, 1.442695
    %v356 = vpow.pop %v355
    %v357 = vmul.f32 %v323, 1.442695
    %v358 = vpow.pop %v357
    %v359 = vmul.f32 %v324, 1.442695
    %v360 = vpow.pop %v359
    %v361 = vmul.f32 %v325, 1.442695
    %v362 = vpow.pop %v361
    %v363 = vmul.f32 %v326, 1.442695
    %v364 = vpow.pop %v363
    %365 = vadd.xlane.f32.xlu0 %v328
    %v366 = vpop.xlane.xlu0 %365
    %367 = vadd.xlane.f32.xlu0 %v330
    %v368 = vpop.xlane.xlu0 %367
    %369 = vadd.xlane.f32.xlu0 %v332
    %v370 = vpop.xlane.xlu0 %369
    %371 = vadd.xlane.f32.xlu0 %v334
    %v372 = vpop.xlane.xlu0 %371
    %373 = vadd.xlane.f32.xlu0 %v336
    %v374 = vpop.xlane.xlu0 %373
    %375 = vadd.xlane.f32.xlu0 %v338
    %v376 = vpop.xlane.xlu0 %375
    %377 = vadd.xlane.f32.xlu0 %v340
    %v378 = vpop.xlane.xlu0 %377
    %379 = vadd.xlane.f32.xlu0 %v342
    %v380 = vpop.xlane.xlu0 %379
    %381 = vadd.xlane.f32.xlu0 %v344
    %v382 = vpop.xlane.xlu0 %381
    %383 = vadd.xlane.f32.xlu0 %v346
    %v384 = vpop.xlane.xlu0 %383
    %385 = vadd.xlane.f32.xlu0 %v348
    %v386 = vpop.xlane.xlu0 %385
    %387 = vadd.xlane.f32.xlu0 %v350
    %v388 = vpop.xlane.xlu0 %387
    %389 = vadd.xlane.f32.xlu0 %v352
    %v390 = vpop.xlane.xlu0 %389
    %391 = vadd.xlane.f32.xlu0 %v354
    %v392 = vpop.xlane.xlu0 %391
    %393 = vadd.xlane.f32.xlu0 %v356
    %v394 = vpop.xlane.xlu0 %393
    %395 = vadd.xlane.f32.xlu0 %v358
    %v396 = vpop.xlane.xlu0 %395
    %397 = vadd.xlane.f32.xlu0 %v360
    %v398 = vpop.xlane.xlu0 %397
    %399 = vadd.xlane.f32.xlu0 %v362
    %v400 = vpop.xlane.xlu0 %399
    %v401 = vsel %vm266, %v364, 0.0
    %402 = vadd.xlane.f32.xlu0 %v401
    %v403 = vpop.xlane.xlu0 %402
    %v404 = vlog2.pop %v366
    %v405 = vmul.f32 %v404, 0.6931472
    %v406 = vlog2.pop %v368
    %v407 = vmul.f32 %v406, 0.6931472
    %v408 = vlog2.pop %v370
    %v409 = vmul.f32 %v408, 0.6931472
    %v410 = vlog2.pop %v372
    %v411 = vmul.f32 %v410, 0.6931472
    %v412 = vlog2.pop %v374
    %v413 = vmul.f32 %v412, 0.6931472
    %v414 = vlog2.pop %v376
    %v415 = vmul.f32 %v414, 0.6931472
    %v416 = vlog2.pop %v378
    %v417 = vmul.f32 %v416, 0.6931472
    %v418 = vlog2.pop %v380
    %v419 = vmul.f32 %v418, 0.6931472
    %v420 = vlog2.pop %v382
    %v421 = vmul.f32 %v420, 0.6931472
    %v422 = vlog2.pop %v384
    %v423 = vmul.f32 %v422, 0.6931472
    %v424 = vlog2.pop %v386
    %v425 = vmul.f32 %v424, 0.6931472
    %v426 = vlog2.pop %v388
    %v427 = vmul.f32 %v426, 0.6931472
    %v428 = vlog2.pop %v390
    %v429 = vmul.f32 %v428, 0.6931472
    %v430 = vlog2.pop %v392
    %v431 = vmul.f32 %v430, 0.6931472
    %v432 = vlog2.pop %v394
    %v433 = vmul.f32 %v432, 0.6931472
    %v434 = vlog2.pop %v396
    %v435 = vmul.f32 %v434, 0.6931472
    %v436 = vlog2.pop %v398
    %v437 = vmul.f32 %v436, 0.6931472
    %v438 = vlog2.pop %v400
    %v439 = vmul.f32 %v438, 0.6931472
    %v440 = vlog2.pop %v403
    %v441 = vmul.f32 %v440, 0.6931472
    %v442 = vadd.f32 %v289, %v405
    %v443 = vadd.f32 %v290, %v407
    %v444 = vadd.f32 %v291, %v409
    %v445 = vadd.f32 %v292, %v411
    %v446 = vadd.f32 %v293, %v413
    %v447 = vadd.f32 %v294, %v415
    %v448 = vadd.f32 %v295, %v417
    %v449 = vadd.f32 %v296, %v419
    %v450 = vadd.f32 %v297, %v421
    %v451 = vadd.f32 %v298, %v423
    %v452 = vadd.f32 %v299, %v425
    %v453 = vadd.f32 %v300, %v427
    %v454 = vadd.f32 %v301, %v429
    %v455 = vadd.f32 %v302, %v431
    %v456 = vadd.f32 %v303, %v433
    %v457 = vadd.f32 %v304, %v435
    %v458 = vadd.f32 %v305, %v437
    %v459 = vadd.f32 %v306, %v439
    %v460 = vadd.f32 %v307, %v441
    %v461 = vsel %vm270, %v442, %v231
    %v462 = vsel %vm271, %v443, %v233
    %v463 = vsel %vm272, %v444, %v235
    %v464 = vsel %vm273, %v445, %v237
    %v465 = vsel %vm274, %v446, %v239
    %v466 = vsel %vm275, %v447, %v241
    %v467 = vsel %vm276, %v448, %v243
    %v468 = vsel %vm277, %v449, %v245
    %v469 = vsel %vm278, %v450, %v247
    %v470 = vsel %vm279, %v451, %v249
    %v471 = vsel %vm280, %v452, %v251
    %v472 = vsel %vm281, %v453, %v253
    %v473 = vsel %vm282, %v454, %v255
    %v474 = vsel %vm283, %v455, %v257
    %v475 = vsel %vm284, %v456, %v259
    %v476 = vsel %vm285, %v457, %v261
    %v477 = vsel %vm286, %v458, %v263
    %v478 = vsel %vm287, %v459, %v265
    %v479 = vsel %vm288, %v460, %v269
    %480 = vmax.xlane.f32.xlu0 %v93
    %v481 = vpop.xlane.xlu0 %480
    %482 = vmax.xlane.f32.xlu0 %v94
    %v483 = vpop.xlane.xlu0 %482
    %484 = vmax.xlane.f32.xlu0 %v95
    %v485 = vpop.xlane.xlu0 %484
    %486 = vmax.xlane.f32.xlu0 %v96
    %v487 = vpop.xlane.xlu0 %486
    %488 = vmax.xlane.f32.xlu0 %v97
    %v489 = vpop.xlane.xlu0 %488
    %490 = vmax.xlane.f32.xlu0 %v98
    %v491 = vpop.xlane.xlu0 %490
    %492 = vmax.xlane.f32.xlu0 %v99
    %v493 = vpop.xlane.xlu0 %492
    %494 = vmax.xlane.f32.xlu0 %v100
    %v495 = vpop.xlane.xlu0 %494
    %496 = vmax.xlane.f32.xlu0 %v101
    %v497 = vpop.xlane.xlu0 %496
    %498 = vmax.xlane.f32.xlu0 %v102
    %v499 = vpop.xlane.xlu0 %498
    %500 = vmax.xlane.f32.xlu0 %v103
    %v501 = vpop.xlane.xlu0 %500
    %502 = vmax.xlane.f32.xlu0 %v104
    %v503 = vpop.xlane.xlu0 %502
    %504 = vmax.xlane.f32.xlu0 %v105
    %v505 = vpop.xlane.xlu0 %504
    %506 = vmax.xlane.f32.xlu0 %v106
    %v507 = vpop.xlane.xlu0 %506
    %508 = vmax.xlane.f32.xlu0 %v107
    %v509 = vpop.xlane.xlu0 %508
    %510 = vmax.xlane.f32.xlu0 %v108
    %v511 = vpop.xlane.xlu0 %510
    %512 = vmax.xlane.f32.xlu0 %v109
    %v513 = vpop.xlane.xlu0 %512
    %514 = vmax.xlane.f32.xlu0 %v110
    %v515 = vpop.xlane.xlu0 %514
    %v516 = vsel %vm266, %v111, -inf
    %517 = vmax.xlane.f32.xlu0 %v516
    %v518 = vpop.xlane.xlu0 %517
    %vm519 = vcmp.gt.f32.partialorder %v481, -inf
    %vm520 = vcmp.gt.f32.partialorder %v483, -inf
    %vm521 = vcmp.gt.f32.partialorder %v485, -inf
    %vm522 = vcmp.gt.f32.partialorder %v487, -inf
    %vm523 = vcmp.gt.f32.partialorder %v489, -inf
    %vm524 = vcmp.gt.f32.partialorder %v491, -inf
    %vm525 = vcmp.gt.f32.partialorder %v493, -inf
    %vm526 = vcmp.gt.f32.partialorder %v495, -inf
    %vm527 = vcmp.gt.f32.partialorder %v497, -inf
    %vm528 = vcmp.gt.f32.partialorder %v499, -inf
    %vm529 = vcmp.gt.f32.partialorder %v501, -inf
    %vm530 = vcmp.gt.f32.partialorder %v503, -inf
    %vm531 = vcmp.gt.f32.partialorder %v505, -inf
    %vm532 = vcmp.gt.f32.partialorder %v507, -inf
    %vm533 = vcmp.gt.f32.partialorder %v509, -inf
    %vm534 = vcmp.gt.f32.partialorder %v511, -inf
    %vm535 = vcmp.gt.f32.partialorder %v513, -inf
    %vm536 = vcmp.gt.f32.partialorder %v515, -inf
    %vm537 = vcmp.gt.f32.partialorder %v518, -inf
    %v538 = vsel %vm519, %v481, 0.0
    %v539 = vsel %vm520, %v483, 0.0
    %v540 = vsel %vm521, %v485, 0.0
    %v541 = vsel %vm522, %v487, 0.0
    %v542 = vsel %vm523, %v489, 0.0
    %v543 = vsel %vm524, %v491, 0.0
    %v544 = vsel %vm525, %v493, 0.0
    %v545 = vsel %vm526, %v495, 0.0
    %v546 = vsel %vm527, %v497, 0.0
    %v547 = vsel %vm528, %v499, 0.0
    %v548 = vsel %vm529, %v501, 0.0
    %v549 = vsel %vm530, %v503, 0.0
    %v550 = vsel %vm531, %v505, 0.0
    %v551 = vsel %vm532, %v507, 0.0
    %v552 = vsel %vm533, %v509, 0.0
    %v553 = vsel %vm534, %v511, 0.0
    %v554 = vsel %vm535, %v513, 0.0
    %v555 = vsel %vm536, %v515, 0.0
    %v556 = vsel %vm537, %v518, 0.0
    %v557 = vsub.f32 %v93, %v538
    %v558 = vsub.f32 %v94, %v539
    %v559 = vsub.f32 %v95, %v540
    %v560 = vsub.f32 %v96, %v541
    %v561 = vsub.f32 %v97, %v542
    %v562 = vsub.f32 %v98, %v543
    %v563 = vsub.f32 %v99, %v544
    %v564 = vsub.f32 %v100, %v545
    %v565 = vsub.f32 %v101, %v546
    %v566 = vsub.f32 %v102, %v547
    %v567 = vsub.f32 %v103, %v548
    %v568 = vsub.f32 %v104, %v549
    %v569 = vsub.f32 %v105, %v550
    %v570 = vsub.f32 %v106, %v551
    %v571 = vsub.f32 %v107, %v552
    %v572 = vsub.f32 %v108, %v553
    %v573 = vsub.f32 %v109, %v554
    %v574 = vsub.f32 %v110, %v555
    %v575 = vsub.f32 %v111, %v556
    %v576 = vmul.f32 %v557, 1.442695
    %v577 = vpow.pop %v576
    %v578 = vmul.f32 %v558, 1.442695
    %v579 = vpow.pop %v578
    %v580 = vmul.f32 %v559, 1.442695
    %v581 = vpow.pop %v580
    %v582 = vmul.f32 %v560, 1.442695
    %v583 = vpow.pop %v582
    %v584 = vmul.f32 %v561, 1.442695
    %v585 = vpow.pop %v584
    %v586 = vmul.f32 %v562, 1.442695
    %v587 = vpow.pop %v586
    %v588 = vmul.f32 %v563, 1.442695
    %v589 = vpow.pop %v588
    %v590 = vmul.f32 %v564, 1.442695
    %v591 = vpow.pop %v590
    %v592 = vmul.f32 %v565, 1.442695
    %v593 = vpow.pop %v592
    %v594 = vmul.f32 %v566, 1.442695
    %v595 = vpow.pop %v594
    %v596 = vmul.f32 %v567, 1.442695
    %v597 = vpow.pop %v596
    %v598 = vmul.f32 %v568, 1.442695
    %v599 = vpow.pop %v598
    %v600 = vmul.f32 %v569, 1.442695
    %v601 = vpow.pop %v600
    %v602 = vmul.f32 %v570, 1.442695
    %v603 = vpow.pop %v602
    %v604 = vmul.f32 %v571, 1.442695
    %v605 = vpow.pop %v604
    %v606 = vmul.f32 %v572, 1.442695
    %v607 = vpow.pop %v606
    %v608 = vmul.f32 %v573, 1.442695
    %v609 = vpow.pop %v608
    %v610 = vmul.f32 %v574, 1.442695
    %v611 = vpow.pop %v610
    %v612 = vmul.f32 %v575, 1.442695
    %v613 = vpow.pop %v612
    %614 = vadd.xlane.f32.xlu0 %v577
    %v615 = vpop.xlane.xlu0 %614
    %616 = vadd.xlane.f32.xlu0 %v579
    %v617 = vpop.xlane.xlu0 %616
    %618 = vadd.xlane.f32.xlu0 %v581
    %v619 = vpop.xlane.xlu0 %618
    %620 = vadd.xlane.f32.xlu0 %v583
    %v621 = vpop.xlane.xlu0 %620
    %622 = vadd.xlane.f32.xlu0 %v585
    %v623 = vpop.xlane.xlu0 %622
    %624 = vadd.xlane.f32.xlu0 %v587
    %v625 = vpop.xlane.xlu0 %624
    %626 = vadd.xlane.f32.xlu0 %v589
    %v627 = vpop.xlane.xlu0 %626
    %628 = vadd.xlane.f32.xlu0 %v591
    %v629 = vpop.xlane.xlu0 %628
    %630 = vadd.xlane.f32.xlu0 %v593
    %v631 = vpop.xlane.xlu0 %630
    %632 = vadd.xlane.f32.xlu0 %v595
    %v633 = vpop.xlane.xlu0 %632
    %634 = vadd.xlane.f32.xlu0 %v597
    %v635 = vpop.xlane.xlu0 %634
    %636 = vadd.xlane.f32.xlu0 %v599
    %v637 = vpop.xlane.xlu0 %636
    %638 = vadd.xlane.f32.xlu0 %v601
    %v639 = vpop.xlane.xlu0 %638
    %640 = vadd.xlane.f32.xlu0 %v603
    %v641 = vpop.xlane.xlu0 %640
    %642 = vadd.xlane.f32.xlu0 %v605
    %v643 = vpop.xlane.xlu0 %642
    %644 = vadd.xlane.f32.xlu0 %v607
    %v645 = vpop.xlane.xlu0 %644
    %646 = vadd.xlane.f32.xlu0 %v609
    %v647 = vpop.xlane.xlu0 %646
    %648 = vadd.xlane.f32.xlu0 %v611
    %v649 = vpop.xlane.xlu0 %648
    %v650 = vsel %vm266, %v613, 0.0
    %651 = vadd.xlane.f32.xlu0 %v650
    %v652 = vpop.xlane.xlu0 %651
    %v653 = vlog2.pop %v615
    %v654 = vmul.f32 %v653, 0.6931472
    %v655 = vlog2.pop %v617
    %v656 = vmul.f32 %v655, 0.6931472
    %v657 = vlog2.pop %v619
    %v658 = vmul.f32 %v657, 0.6931472
    %v659 = vlog2.pop %v621
    %v660 = vmul.f32 %v659, 0.6931472
    %v661 = vlog2.pop %v623
    %v662 = vmul.f32 %v661, 0.6931472
    %v663 = vlog2.pop %v625
    %v664 = vmul.f32 %v663, 0.6931472
    %v665 = vlog2.pop %v627
    %v666 = vmul.f32 %v665, 0.6931472
    %v667 = vlog2.pop %v629
    %v668 = vmul.f32 %v667, 0.6931472
    %v669 = vlog2.pop %v631
    %v670 = vmul.f32 %v669, 0.6931472
    %v671 = vlog2.pop %v633
    %v672 = vmul.f32 %v671, 0.6931472
    %v673 = vlog2.pop %v635
    %v674 = vmul.f32 %v673, 0.6931472
    %v675 = vlog2.pop %v637
    %v676 = vmul.f32 %v675, 0.6931472
    %v677 = vlog2.pop %v639
    %v678 = vmul.f32 %v677, 0.6931472
    %v679 = vlog2.pop %v641
    %v680 = vmul.f32 %v679, 0.6931472
    %v681 = vlog2.pop %v643
    %v682 = vmul.f32 %v681, 0.6931472
    %v683 = vlog2.pop %v645
    %v684 = vmul.f32 %v683, 0.6931472
    %v685 = vlog2.pop %v647
    %v686 = vmul.f32 %v685, 0.6931472
    %v687 = vlog2.pop %v649
    %v688 = vmul.f32 %v687, 0.6931472
    %v689 = vlog2.pop %v652
    %v690 = vmul.f32 %v689, 0.6931472
    %v691 = vadd.f32 %v538, %v654
    %v692 = vadd.f32 %v539, %v656
    %v693 = vadd.f32 %v540, %v658
    %v694 = vadd.f32 %v541, %v660
    %v695 = vadd.f32 %v542, %v662
    %v696 = vadd.f32 %v543, %v664
    %v697 = vadd.f32 %v544, %v666
    %v698 = vadd.f32 %v545, %v668
    %v699 = vadd.f32 %v546, %v670
    %v700 = vadd.f32 %v547, %v672
    %v701 = vadd.f32 %v548, %v674
    %v702 = vadd.f32 %v549, %v676
    %v703 = vadd.f32 %v550, %v678
    %v704 = vadd.f32 %v551, %v680
    %v705 = vadd.f32 %v552, %v682
    %v706 = vadd.f32 %v553, %v684
    %v707 = vadd.f32 %v554, %v686
    %v708 = vadd.f32 %v555, %v688
    %v709 = vadd.f32 %v556, %v690
    %v710 = vsel %vm519, %v691, %v481
    %v711 = vsel %vm520, %v692, %v483
    %v712 = vsel %vm521, %v693, %v485
    %v713 = vsel %vm522, %v694, %v487
    %v714 = vsel %vm523, %v695, %v489
    %v715 = vsel %vm524, %v696, %v491
    %v716 = vsel %vm525, %v697, %v493
    %v717 = vsel %vm526, %v698, %v495
    %v718 = vsel %vm527, %v699, %v497
    %v719 = vsel %vm528, %v700, %v499
    %v720 = vsel %vm529, %v701, %v501
    %v721 = vsel %vm530, %v702, %v503
    %v722 = vsel %vm531, %v703, %v505
    %v723 = vsel %vm532, %v704, %v507
    %v724 = vsel %vm533, %v705, %v509
    %v725 = vsel %vm534, %v706, %v511
    %v726 = vsel %vm535, %v707, %v513
    %v727 = vsel %vm536, %v708, %v515
    %v728 = vsel %vm537, %v709, %v518
    %v729 = vld [vmem:[#allocation2] sm:$0xff]
    %v730 = vld [vmem:[#allocation2 + $0x8] sm:$0xff]
    %v731 = vld [vmem:[#allocation2 + $0x10] sm:$0xff]
    %v732 = vld [vmem:[#allocation2 + $0x18] sm:$0xff]
    %v733 = vld [vmem:[#allocation2 + $0x20] sm:$0xff]
    %v734 = vld [vmem:[#allocation2 + $0x28] sm:$0xff]
    %v735 = vld [vmem:[#allocation2 + $0x30] sm:$0xff]
    %v736 = vld [vmem:[#allocation2 + $0x38] sm:$0xff]
    %v737 = vld [vmem:[#allocation2 + $0x40] sm:$0xff]
    %v738 = vld [vmem:[#allocation2 + $0x48] sm:$0xff]
    %v739 = vld [vmem:[#allocation2 + $0x50] sm:$0xff]
    %v740 = vld [vmem:[#allocation2 + $0x58] sm:$0xff]
    %v741 = vld [vmem:[#allocation2 + $0x60] sm:$0xff]
    %v742 = vld [vmem:[#allocation2 + $0x68] sm:$0xff]
    %v743 = vld [vmem:[#allocation2 + $0x70] sm:$0xff]
    %v744 = vld [vmem:[#allocation2 + $0x78] sm:$0xff]
    %v745 = vld [vmem:[#allocation2 + $0x80] sm:$0xff]
    %v746 = vld [vmem:[#allocation2 + $0x88] sm:$0xff]
    %v747 = vld [vmem:[#allocation2 + $0x90] sm:$0x3f]
    %v748 = vsub.f32 %v710, %v461
    %v749 = vsub.f32 %v711, %v462
    %v750 = vsub.f32 %v712, %v463
    %v751 = vsub.f32 %v713, %v464
    %v752 = vsub.f32 %v714, %v465
    %v753 = vsub.f32 %v715, %v466
    %v754 = vsub.f32 %v716, %v467
    %v755 = vsub.f32 %v717, %v468
    %v756 = vsub.f32 %v718, %v469
    %v757 = vsub.f32 %v719, %v470
    %v758 = vsub.f32 %v720, %v471
    %v759 = vsub.f32 %v721, %v472
    %v760 = vsub.f32 %v722, %v473
    %v761 = vsub.f32 %v723, %v474
    %v762 = vsub.f32 %v724, %v475
    %v763 = vsub.f32 %v725, %v476
    %v764 = vsub.f32 %v726, %v477
    %v765 = vsub.f32 %v727, %v478
    %v766 = vsub.f32 %v728, %v479
    %v767 = vsel %vm173, %v748, 0.0
    %v768 = vsel %vm174, %v749, 0.0
    %v769 = vsel %vm175, %v750, 0.0
    %v770 = vsel %vm176, %v751, 0.0
    %v771 = vsel %vm177, %v752, 0.0
    %v772 = vsel %vm178, %v753, 0.0
    %v773 = vsel %vm179, %v754, 0.0
    %v774 = vsel %vm180, %v755, 0.0
    %v775 = vsel %vm181, %v756, 0.0
    %v776 = vsel %vm182, %v757, 0.0
    %v777 = vsel %vm183, %v758, 0.0
    %v778 = vsel %vm184, %v759, 0.0
    %v779 = vsel %vm185, %v760, 0.0
    %v780 = vsel %vm186, %v761, 0.0
    %v781 = vsel %vm187, %v762, 0.0
    %v782 = vsel %vm188, %v763, 0.0
    %v783 = vsel %vm189, %v764, 0.0
    %v784 = vsel %vm190, %v765, 0.0
    %v785 = vsel %vm191, %v766, 0.0
    %v786 = vadd.f32 %v729, %v767
    %v787 = vadd.f32 %v730, %v768
    %v788 = vadd.f32 %v731, %v769
    %v789 = vadd.f32 %v732, %v770
    %v790 = vadd.f32 %v733, %v771
    %v791 = vadd.f32 %v734, %v772
    %v792 = vadd.f32 %v735, %v773
    %v793 = vadd.f32 %v736, %v774
    %v794 = vadd.f32 %v737, %v775
    %v795 = vadd.f32 %v738, %v776
    %v796 = vadd.f32 %v739, %v777
    %v797 = vadd.f32 %v740, %v778
    %v798 = vadd.f32 %v741, %v779
    %v799 = vadd.f32 %v742, %v780
    %v800 = vadd.f32 %v743, %v781
    %v801 = vadd.f32 %v744, %v782
    %v802 = vadd.f32 %v745, %v783
    %v803 = vadd.f32 %v746, %v784
    %v804 = vadd.f32 %v747, %v785
    %vm805 = vcmask 7168
    %806 = vst.msk [vmem:[#allocation2] sm:$0xff] %vm805, %v786
    %807 = vst.msk [vmem:[#allocation2 + $0x8] sm:$0xff] %vm805, %v787
    %808 = vst.msk [vmem:[#allocation2 + $0x10] sm:$0xff] %vm805, %v788
    %809 = vst.msk [vmem:[#allocation2 + $0x18] sm:$0xff] %vm805, %v789
    %810 = vst.msk [vmem:[#allocation2 + $0x20] sm:$0xff] %vm805, %v790
    %811 = vst.msk [vmem:[#allocation2 + $0x28] sm:$0xff] %vm805, %v791
    %812 = vst.msk [vmem:[#allocation2 + $0x30] sm:$0xff] %vm805, %v792
    %813 = vst.msk [vmem:[#allocation2 + $0x38] sm:$0xff] %vm805, %v793
    %814 = vst.msk [vmem:[#allocation2 + $0x40] sm:$0xff] %vm805, %v794
    %815 = vst.msk [vmem:[#allocation2 + $0x48] sm:$0xff] %vm805, %v795
    %816 = vst.msk [vmem:[#allocation2 + $0x50] sm:$0xff] %vm805, %v796
    %817 = vst.msk [vmem:[#allocation2 + $0x58] sm:$0xff] %vm805, %v797
    %818 = vst.msk [vmem:[#allocation2 + $0x60] sm:$0xff] %vm805, %v798
    %819 = vst.msk [vmem:[#allocation2 + $0x68] sm:$0xff] %vm805, %v799
    %820 = vst.msk [vmem:[#allocation2 + $0x70] sm:$0xff] %vm805, %v800
    %821 = vst.msk [vmem:[#allocation2 + $0x78] sm:$0xff] %vm805, %v801
    %822 = vst.msk [vmem:[#allocation2 + $0x80] sm:$0xff] %vm805, %v802
    %823 = vst.msk [vmem:[#allocation2 + $0x88] sm:$0xff] %vm805, %v803
    %vm824 = vcmask 5120
    %825 = vst.msk [vmem:[#allocation2 + $0x90] sm:$0x3f] %vm824, %v804
    %v826 = vmax.f32 %v93, -50.0
    %v827 = vmax.f32 %v94, -50.0
    %v828 = vmax.f32 %v95, -50.0
    %v829 = vmax.f32 %v96, -50.0
    %v830 = vmax.f32 %v97, -50.0
    %v831 = vmax.f32 %v98, -50.0
    %v832 = vmax.f32 %v99, -50.0
    %v833 = vmax.f32 %v100, -50.0
    %v834 = vmax.f32 %v101, -50.0
    %v835 = vmax.f32 %v102, -50.0
    %v836 = vmax.f32 %v103, -50.0
    %v837 = vmax.f32 %v104, -50.0
    %v838 = vmax.f32 %v105, -50.0
    %v839 = vmax.f32 %v106, -50.0
    %v840 = vmax.f32 %v107, -50.0
    %v841 = vmax.f32 %v108, -50.0
    %v842 = vmax.f32 %v109, -50.0
    %v843 = vmax.f32 %v110, -50.0
    %v844 = vmax.f32 %v111, -50.0
    %v845 = vmin.f32 %v826, 50.0
    %v846 = vmin.f32 %v827, 50.0
    %v847 = vmin.f32 %v828, 50.0
    %v848 = vmin.f32 %v829, 50.0
    %v849 = vmin.f32 %v830, 50.0
    %v850 = vmin.f32 %v831, 50.0
    %v851 = vmin.f32 %v832, 50.0
    %v852 = vmin.f32 %v833, 50.0
    %v853 = vmin.f32 %v834, 50.0
    %v854 = vmin.f32 %v835, 50.0
    %v855 = vmin.f32 %v836, 50.0
    %v856 = vmin.f32 %v837, 50.0
    %v857 = vmin.f32 %v838, 50.0
    %v858 = vmin.f32 %v839, 50.0
    %v859 = vmin.f32 %v840, 50.0
    %v860 = vmin.f32 %v841, 50.0
    %v861 = vmin.f32 %v842, 50.0
    %v862 = vmin.f32 %v843, 50.0
    %v863 = vmin.f32 %v844, 50.0
    %v864 = vmax.f32 %v845, 0.0
    %v865 = vmax.f32 %v846, 0.0
    %v866 = vmax.f32 %v847, 0.0
    %v867 = vmax.f32 %v848, 0.0
    %v868 = vmax.f32 %v849, 0.0
    %v869 = vmax.f32 %v850, 0.0
    %v870 = vmax.f32 %v851, 0.0
    %v871 = vmax.f32 %v852, 0.0
    %v872 = vmax.f32 %v853, 0.0
    %v873 = vmax.f32 %v854, 0.0
    %v874 = vmax.f32 %v855, 0.0
    %v875 = vmax.f32 %v856, 0.0
    %v876 = vmax.f32 %v857, 0.0
    %v877 = vmax.f32 %v858, 0.0
    %v878 = vmax.f32 %v859, 0.0
    %v879 = vmax.f32 %v860, 0.0
    %v880 = vmax.f32 %v861, 0.0
    %v881 = vmax.f32 %v862, 0.0
    %v882 = vmax.f32 %v863, 0.0
    %v883 = vmul.f32 %v845, %v112
    %v884 = vmul.f32 %v846, %v113
    %v885 = vmul.f32 %v847, %v114
    %v886 = vmul.f32 %v848, %v115
    %v887 = vmul.f32 %v849, %v116
    %v888 = vmul.f32 %v850, %v117
    %v889 = vmul.f32 %v851, %v118
    %v890 = vmul.f32 %v852, %v119
    %v891 = vmul.f32 %v853, %v120
    %v892 = vmul.f32 %v854, %v121
    %v893 = vmul.f32 %v855, %v122
    %v894 = vmul.f32 %v856, %v123
    %v895 = vmul.f32 %v857, %v124
    %v896 = vmul.f32 %v858, %v125
    %v897 = vmul.f32 %v859, %v126
    %v898 = vmul.f32 %v860, %v127
    %v899 = vmul.f32 %v861, %v128
    %v900 = vmul.f32 %v862, %v129
    %v901 = vmul.f32 %v863, %v130
    %v902 = vsub.f32 %v864, %v883
    %v903 = vsub.f32 %v865, %v884
    %v904 = vsub.f32 %v866, %v885
    %v905 = vsub.f32 %v867, %v886
    %v906 = vsub.f32 %v868, %v887
    %v907 = vsub.f32 %v869, %v888
    %v908 = vsub.f32 %v870, %v889
    %v909 = vsub.f32 %v871, %v890
    %v910 = vsub.f32 %v872, %v891
    %v911 = vsub.f32 %v873, %v892
    %v912 = vsub.f32 %v874, %v893
    %v913 = vsub.f32 %v875, %v894
    %v914 = vsub.f32 %v876, %v895
    %v915 = vsub.f32 %v877, %v896
    %v916 = vsub.f32 %v878, %v897
    %v917 = vsub.f32 %v879, %v898
    %v918 = vsub.f32 %v880, %v899
    %v919 = vsub.f32 %v881, %v900
    %v920 = vsub.f32 %v882, %v901
    %v921 = vand.u32 2147483647, %v845
    %v922 = vand.u32 2147483647, %v846
    %v923 = vand.u32 2147483647, %v847
    %v924 = vand.u32 2147483647, %v848
    %v925 = vand.u32 2147483647, %v849
    %v926 = vand.u32 2147483647, %v850
    %v927 = vand.u32 2147483647, %v851
    %v928 = vand.u32 2147483647, %v852
    %v929 = vand.u32 2147483647, %v853
    %v930 = vand.u32 2147483647, %v854
    %v931 = vand.u32 2147483647, %v855
    %v932 = vand.u32 2147483647, %v856
    %v933 = vand.u32 2147483647, %v857
    %v934 = vand.u32 2147483647, %v858
    %v935 = vand.u32 2147483647, %v859
    %v936 = vand.u32 2147483647, %v860
    %v937 = vand.u32 2147483647, %v861
    %v938 = vand.u32 2147483647, %v862
    %v939 = vand.u32 2147483647, %v863
    %v940 = vsub.f32 0.0, %v921
    %v941 = vsub.f32 0.0, %v922
    %v942 = vsub.f32 0.0, %v923
    %v943 = vsub.f32 0.0, %v924
    %v944 = vsub.f32 0.0, %v925
    %v945 = vsub.f32 0.0, %v926
    %v946 = vsub.f32 0.0, %v927
    %v947 = vsub.f32 0.0, %v928
    %v948 = vsub.f32 0.0, %v929
    %v949 = vsub.f32 0.0, %v930
    %v950 = vsub.f32 0.0, %v931
    %v951 = vsub.f32 0.0, %v932
    %v952 = vsub.f32 0.0, %v933
    %v953 = vsub.f32 0.0, %v934
    %v954 = vsub.f32 0.0, %v935
    %v955 = vsub.f32 0.0, %v936
    %v956 = vsub.f32 0.0, %v937
    %v957 = vsub.f32 0.0, %v938
    %v958 = vsub.f32 0.0, %v939
    %v959 = vmul.f32 %v940, 1.442695
    %v960 = vpow.pop %v959
    %v961 = vmul.f32 %v941, 1.442695
    %v962 = vpow.pop %v961
    %v963 = vmul.f32 %v942, 1.442695
    %v964 = vpow.pop %v963
    %v965 = vmul.f32 %v943, 1.442695
    %v966 = vpow.pop %v965
    %v967 = vmul.f32 %v944, 1.442695
    %v968 = vpow.pop %v967
    %v969 = vmul.f32 %v945, 1.442695
    %v970 = vpow.pop %v969
    %v971 = vmul.f32 %v946, 1.442695
    %v972 = vpow.pop %v971
    %v973 = vmul.f32 %v947, 1.442695
    %v974 = vpow.pop %v973
    %v975 = vmul.f32 %v948, 1.442695
    %v976 = vpow.pop %v975
    %v977 = vmul.f32 %v949, 1.442695
    %v978 = vpow.pop %v977
    %v979 = vmul.f32 %v950, 1.442695
    %v980 = vpow.pop %v979
    %v981 = vmul.f32 %v951, 1.442695
    %v982 = vpow.pop %v981
    %v983 = vmul.f32 %v952, 1.442695
    %v984 = vpow.pop %v983
    %v985 = vmul.f32 %v953, 1.442695
    %v986 = vpow.pop %v985
    %v987 = vmul.f32 %v954, 1.442695
    %v988 = vpow.pop %v987
    %v989 = vmul.f32 %v955, 1.442695
    %v990 = vpow.pop %v989
    %v991 = vmul.f32 %v956, 1.442695
    %v992 = vpow.pop %v991
    %v993 = vmul.f32 %v957, 1.442695
    %v994 = vpow.pop %v993
    %v995 = vmul.f32 %v958, 1.442695
    %v996 = vpow.pop %v995
    %v997 = vadd.f32 %v960, 1.0
    %v998 = vlog2.pop %v997
    %v999 = vmul.f32 %v998, 0.6931472
    %v1000 = vmul.f32 -0.5, %v960
    %v1001 = vadd.f32 %v1000, 1.0
    %v1002 = vmul.f32 %v1001, %v960
    %v1003 = vand.u32 2147483647, %v960
    %vm1004 = vcmp.lt.f32.partialorder %v1003, 0.0004427343
    %v1005 = vsel %vm1004, %v1002, %v999
    %v1006 = vadd.f32 %v962, 1.0
    %v1007 = vlog2.pop %v1006
    %v1008 = vmul.f32 %v1007, 0.6931472
    %v1009 = vmul.f32 -0.5, %v962
    %v1010 = vadd.f32 %v1009, 1.0
    %v1011 = vmul.f32 %v1010, %v962
    %v1012 = vand.u32 2147483647, %v962
    %vm1013 = vcmp.lt.f32.partialorder %v1012, 0.0004427343
    %v1014 = vsel %vm1013, %v1011, %v1008
    %v1015 = vadd.f32 %v964, 1.0
    %v1016 = vlog2.pop %v1015
    %v1017 = vmul.f32 %v1016, 0.6931472
    %v1018 = vmul.f32 -0.5, %v964
    %v1019 = vadd.f32 %v1018, 1.0
    %v1020 = vmul.f32 %v1019, %v964
    %v1021 = vand.u32 2147483647, %v964
    %vm1022 = vcmp.lt.f32.partialorder %v1021, 0.0004427343
    %v1023 = vsel %vm1022, %v1020, %v1017
    %v1024 = vadd.f32 %v966, 1.0
    %v1025 = vlog2.pop %v1024
    %v1026 = vmul.f32 %v1025, 0.6931472
    %v1027 = vmul.f32 -0.5, %v966
    %v1028 = vadd.f32 %v1027, 1.0
    %v1029 = vmul.f32 %v1028, %v966
    %v1030 = vand.u32 2147483647, %v966
    %vm1031 = vcmp.lt.f32.partialorder %v1030, 0.0004427343
    %v1032 = vsel %vm1031, %v1029, %v1026
    %v1033 = vadd.f32 %v968, 1.0
    %v1034 = vlog2.pop %v1033
    %v1035 = vmul.f32 %v1034, 0.6931472
    %v1036 = vmul.f32 -0.5, %v968
    %v1037 = vadd.f32 %v1036, 1.0
    %v1038 = vmul.f32 %v1037, %v968
    %v1039 = vand.u32 2147483647, %v968
    %vm1040 = vcmp.lt.f32.partialorder %v1039, 0.0004427343
    %v1041 = vsel %vm1040, %v1038, %v1035
    %v1042 = vadd.f32 %v970, 1.0
    %v1043 = vlog2.pop %v1042
    %v1044 = vmul.f32 %v1043, 0.6931472
    %v1045 = vmul.f32 -0.5, %v970
    %v1046 = vadd.f32 %v1045, 1.0
    %v1047 = vmul.f32 %v1046, %v970
    %v1048 = vand.u32 2147483647, %v970
    %vm1049 = vcmp.lt.f32.partialorder %v1048, 0.0004427343
    %v1050 = vsel %vm1049, %v1047, %v1044
    %v1051 = vadd.f32 %v972, 1.0
    %v1052 = vlog2.pop %v1051
    %v1053 = vmul.f32 %v1052, 0.6931472
    %v1054 = vmul.f32 -0.5, %v972
    %v1055 = vadd.f32 %v1054, 1.0
    %v1056 = vmul.f32 %v1055, %v972
    %v1057 = vand.u32 2147483647, %v972
    %vm1058 = vcmp.lt.f32.partialorder %v1057, 0.0004427343
    %v1059 = vsel %vm1058, %v1056, %v1053
    %v1060 = vadd.f32 %v974, 1.0
    %v1061 = vlog2.pop %v1060
    %v1062 = vmul.f32 %v1061, 0.6931472
    %v1063 = vmul.f32 -0.5, %v974
    %v1064 = vadd.f32 %v1063, 1.0
    %v1065 = vmul.f32 %v1064, %v974
    %v1066 = vand.u32 2147483647, %v974
    %vm1067 = vcmp.lt.f32.partialorder %v1066, 0.0004427343
    %v1068 = vsel %vm1067, %v1065, %v1062
    %v1069 = vadd.f32 %v976, 1.0
    %v1070 = vlog2.pop %v1069
    %v1071 = vmul.f32 %v1070, 0.6931472
    %v1072 = vmul.f32 -0.5, %v976
    %v1073 = vadd.f32 %v1072, 1.0
    %v1074 = vmul.f32 %v1073, %v976
    %v1075 = vand.u32 2147483647, %v976
    %vm1076 = vcmp.lt.f32.partialorder %v1075, 0.0004427343
    %v1077 = vsel %vm1076, %v1074, %v1071
    %v1078 = vadd.f32 %v978, 1.0
    %v1079 = vlog2.pop %v1078
    %v1080 = vmul.f32 %v1079, 0.6931472
    %v1081 = vmul.f32 -0.5, %v978
    %v1082 = vadd.f32 %v1081, 1.0
    %v1083 = vmul.f32 %v1082, %v978
    %v1084 = vand.u32 2147483647, %v978
    %vm1085 = vcmp.lt.f32.partialorder %v1084, 0.0004427343
    %v1086 = vsel %vm1085, %v1083, %v1080
    %v1087 = vadd.f32 %v980, 1.0
    %v1088 = vlog2.pop %v1087
    %v1089 = vmul.f32 %v1088, 0.6931472
    %v1090 = vmul.f32 -0.5, %v980
    %v1091 = vadd.f32 %v1090, 1.0
    %v1092 = vmul.f32 %v1091, %v980
    %v1093 = vand.u32 2147483647, %v980
    %vm1094 = vcmp.lt.f32.partialorder %v1093, 0.0004427343
    %v1095 = vsel %vm1094, %v1092, %v1089
    %v1096 = vadd.f32 %v982, 1.0
    %v1097 = vlog2.pop %v1096
    %v1098 = vmul.f32 %v1097, 0.6931472
    %v1099 = vmul.f32 -0.5, %v982
    %v1100 = vadd.f32 %v1099, 1.0
    %v1101 = vmul.f32 %v1100, %v982
    %v1102 = vand.u32 2147483647, %v982
    %vm1103 = vcmp.lt.f32.partialorder %v1102, 0.0004427343
    %v1104 = vsel %vm1103, %v1101, %v1098
    %v1105 = vadd.f32 %v984, 1.0
    %v1106 = vlog2.pop %v1105
    %v1107 = vmul.f32 %v1106, 0.6931472
    %v1108 = vmul.f32 -0.5, %v984
    %v1109 = vadd.f32 %v1108, 1.0
    %v1110 = vmul.f32 %v1109, %v984
    %v1111 = vand.u32 2147483647, %v984
    %vm1112 = vcmp.lt.f32.partialorder %v1111, 0.0004427343
    %v1113 = vsel %vm1112, %v1110, %v1107
    %v1114 = vadd.f32 %v986, 1.0
    %v1115 = vlog2.pop %v1114
    %v1116 = vmul.f32 %v1115, 0.6931472
    %v1117 = vmul.f32 -0.5, %v986
    %v1118 = vadd.f32 %v1117, 1.0
    %v1119 = vmul.f32 %v1118, %v986
    %v1120 = vand.u32 2147483647, %v986
    %vm1121 = vcmp.lt.f32.partialorder %v1120, 0.0004427343
    %v1122 = vsel %vm1121, %v1119, %v1116
    %v1123 = vadd.f32 %v988, 1.0
    %v1124 = vlog2.pop %v1123
    %v1125 = vmul.f32 %v1124, 0.6931472
    %v1126 = vmul.f32 -0.5, %v988
    %v1127 = vadd.f32 %v1126, 1.0
    %v1128 = vmul.f32 %v1127, %v988
    %v1129 = vand.u32 2147483647, %v988
    %vm1130 = vcmp.lt.f32.partialorder %v1129, 0.0004427343
    %v1131 = vsel %vm1130, %v1128, %v1125
    %v1132 = vadd.f32 %v990, 1.0
    %v1133 = vlog2.pop %v1132
    %v1134 = vmul.f32 %v1133, 0.6931472
    %v1135 = vmul.f32 -0.5, %v990
    %v1136 = vadd.f32 %v1135, 1.0
    %v1137 = vmul.f32 %v1136, %v990
    %v1138 = vand.u32 2147483647, %v990
    %vm1139 = vcmp.lt.f32.partialorder %v1138, 0.0004427343
    %v1140 = vsel %vm1139, %v1137, %v1134
    %v1141 = vadd.f32 %v992, 1.0
    %v1142 = vlog2.pop %v1141
    %v1143 = vmul.f32 %v1142, 0.6931472
    %v1144 = vmul.f32 -0.5, %v992
    %v1145 = vadd.f32 %v1144, 1.0
    %v1146 = vmul.f32 %v1145, %v992
    %v1147 = vand.u32 2147483647, %v992
    %vm1148 = vcmp.lt.f32.partialorder %v1147, 0.0004427343
    %v1149 = vsel %vm1148, %v1146, %v1143
    %v1150 = vadd.f32 %v994, 1.0
    %v1151 = vlog2.pop %v1150
    %v1152 = vmul.f32 %v1151, 0.6931472
    %v1153 = vmul.f32 -0.5, %v994
    %v1154 = vadd.f32 %v1153, 1.0
    %v1155 = vmul.f32 %v1154, %v994
    %v1156 = vand.u32 2147483647, %v994
    %vm1157 = vcmp.lt.f32.partialorder %v1156, 0.0004427343
    %v1158 = vsel %vm1157, %v1155, %v1152
    %v1159 = vadd.f32 %v996, 1.0
    %v1160 = vlog2.pop %v1159
    %v1161 = vmul.f32 %v1160, 0.6931472
    %v1162 = vmul.f32 -0.5, %v996
    %v1163 = vadd.f32 %v1162, 1.0
    %v1164 = vmul.f32 %v1163, %v996
    %v1165 = vand.u32 2147483647, %v996
    %vm1166 = vcmp.lt.f32.partialorder %v1165, 0.0004427343
    %v1167 = vsel %vm1166, %v1164, %v1161
    %v1168 = vadd.f32 %v902, %v1005
    %v1169 = vadd.f32 %v903, %v1014
    %v1170 = vadd.f32 %v904, %v1023
    %v1171 = vadd.f32 %v905, %v1032
    %v1172 = vadd.f32 %v906, %v1041
    %v1173 = vadd.f32 %v907, %v1050
    %v1174 = vadd.f32 %v908, %v1059
    %v1175 = vadd.f32 %v909, %v1068
    %v1176 = vadd.f32 %v910, %v1077
    %v1177 = vadd.f32 %v911, %v1086
    %v1178 = vadd.f32 %v912, %v1095
    %v1179 = vadd.f32 %v913, %v1104
    %v1180 = vadd.f32 %v914, %v1113
    %v1181 = vadd.f32 %v915, %v1122
    %v1182 = vadd.f32 %v916, %v1131
    %v1183 = vadd.f32 %v917, %v1140
    %v1184 = vadd.f32 %v918, %v1149
    %v1185 = vadd.f32 %v919, %v1158
    %v1186 = vadd.f32 %v920, %v1167
    %v1187 = vsel %vm173, 1, 0
    %v1188 = vsel %vm174, 1, 0
    %v1189 = vsel %vm175, 1, 0
    %v1190 = vsel %vm176, 1, 0
    %v1191 = vsel %vm177, 1, 0
    %v1192 = vsel %vm178, 1, 0
    %v1193 = vsel %vm179, 1, 0
    %v1194 = vsel %vm180, 1, 0
    %v1195 = vsel %vm181, 1, 0
    %v1196 = vsel %vm182, 1, 0
    %v1197 = vsel %vm183, 1, 0
    %v1198 = vsel %vm184, 1, 0
    %v1199 = vsel %vm185, 1, 0
    %v1200 = vsel %vm186, 1, 0
    %v1201 = vsel %vm187, 1, 0
    %v1202 = vsel %vm188, 1, 0
    %v1203 = vsel %vm189, 1, 0
    %v1204 = vsel %vm190, 1, 0
    %v1205 = vsel %vm191, 1, 0
    %vm1206 = vcmp.eq.s32.totalorder %v1187, 1
    %vm1207 = vcmp.eq.s32.totalorder %v1188, 1
    %vm1208 = vcmp.eq.s32.totalorder %v1189, 1
    %vm1209 = vcmp.eq.s32.totalorder %v1190, 1
    %vm1210 = vcmp.eq.s32.totalorder %v1191, 1
    %vm1211 = vcmp.eq.s32.totalorder %v1192, 1
    %vm1212 = vcmp.eq.s32.totalorder %v1193, 1
    %vm1213 = vcmp.eq.s32.totalorder %v1194, 1
    %vm1214 = vcmp.eq.s32.totalorder %v1195, 1
    %vm1215 = vcmp.eq.s32.totalorder %v1196, 1
    %vm1216 = vcmp.eq.s32.totalorder %v1197, 1
    %vm1217 = vcmp.eq.s32.totalorder %v1198, 1
    %vm1218 = vcmp.eq.s32.totalorder %v1199, 1
    %vm1219 = vcmp.eq.s32.totalorder %v1200, 1
    %vm1220 = vcmp.eq.s32.totalorder %v1201, 1
    %vm1221 = vcmp.eq.s32.totalorder %v1202, 1
    %vm1222 = vcmp.eq.s32.totalorder %v1203, 1
    %vm1223 = vcmp.eq.s32.totalorder %v1204, 1
    %vm1224 = vcmp.eq.s32.totalorder %v1205, 1
    %v1225 = vsel %vm1206, %v1168, 0.0
    %v1226 = vsel %vm1207, %v1169, 0.0
    %v1227 = vsel %vm1208, %v1170, 0.0
    %v1228 = vsel %vm1209, %v1171, 0.0
    %v1229 = vsel %vm1210, %v1172, 0.0
    %v1230 = vsel %vm1211, %v1173, 0.0
    %v1231 = vsel %vm1212, %v1174, 0.0
    %v1232 = vsel %vm1213, %v1175, 0.0
    %v1233 = vsel %vm1214, %v1176, 0.0
    %v1234 = vsel %vm1215, %v1177, 0.0
    %v1235 = vsel %vm1216, %v1178, 0.0
    %v1236 = vsel %vm1217, %v1179, 0.0
    %v1237 = vsel %vm1218, %v1180, 0.0
    %v1238 = vsel %vm1219, %v1181, 0.0
    %v1239 = vsel %vm1220, %v1182, 0.0
    %v1240 = vsel %vm1221, %v1183, 0.0
    %v1241 = vsel %vm1222, %v1184, 0.0
    %v1242 = vsel %vm1223, %v1185, 0.0
    %v1243 = vsel %vm1224, %v1186, 0.0
    %v1244 = vld [vmem:[#allocation3] sm:$0x1]
    %v1245 = vadd.f32 %v1225, %v1226
    %v1246 = vadd.f32 %v1245, %v1227
    %v1247 = vadd.f32 %v1246, %v1228
    %v1248 = vadd.f32 %v1247, %v1229
    %v1249 = vadd.f32 %v1248, %v1230
    %v1250 = vadd.f32 %v1249, %v1231
    %v1251 = vadd.f32 %v1250, %v1232
    %v1252 = vadd.f32 %v1251, %v1233
    %v1253 = vadd.f32 %v1252, %v1234
    %v1254 = vadd.f32 %v1253, %v1235
    %v1255 = vadd.f32 %v1254, %v1236
    %v1256 = vadd.f32 %v1255, %v1237
    %v1257 = vadd.f32 %v1256, %v1238
    %v1258 = vadd.f32 %v1257, %v1239
    %v1259 = vadd.f32 %v1258, %v1240
    %v1260 = vadd.f32 %v1259, %v1241
    %v1261 = vadd.f32 %v1260, %v1242
    %v1262 = vsel %vm266, %v1243, 0.0
    %v1263 = vadd.f32 %v1261, %v1262
    %v1264 = vrot.slane %v1263, 4
    %v1265 = vadd.f32 %v1263, %v1264
    %v1266 = vrot.slane %v1265, 2
    %v1267 = vadd.f32 %v1265, %v1266
    %v1268 = vrot.slane %v1267, 1
    %v1269 = vadd.f32 %v1267, %v1268
    %v1270 = vadd.f32 %v1244, %v1269
    %1271 = vst [vmem:[#allocation3] sm:$0x1] %v1270
    // Predicated region
    $region22: #{tpu_custom_call.1} parent=1 // pred_check
      %p1272 = pneg %p67
    $region23: #{tpu_custom_call.1} parent=1 // pred_check_branch
      %1274 = sbr.rel (%p1272) target = $region25
    $region24: #{tpu_custom_call.1} parent=1 // pred_region
      %v1275 = vld [vmem:[#allocation2] sm:$0xff]
      %v1276 = vld [vmem:[#allocation2 + $0x8] sm:$0xff]
      %v1277 = vld [vmem:[#allocation2 + $0x10] sm:$0xff]
      %v1278 = vld [vmem:[#allocation2 + $0x18] sm:$0xff]
      %v1279 = vld [vmem:[#allocation2 + $0x20] sm:$0xff]
      %v1280 = vld [vmem:[#allocation2 + $0x28] sm:$0xff]
      %v1281 = vld [vmem:[#allocation2 + $0x30] sm:$0xff]
      %v1282 = vld [vmem:[#allocation2 + $0x38] sm:$0xff]
      %v1283 = vld [vmem:[#allocation2 + $0x40] sm:$0xff]
      %v1284 = vld [vmem:[#allocation2 + $0x48] sm:$0xff]
      %v1285 = vld [vmem:[#allocation2 + $0x50] sm:$0xff]
      %v1286 = vld [vmem:[#allocation2 + $0x58] sm:$0xff]
      %v1287 = vld [vmem:[#allocation2 + $0x60] sm:$0xff]
      %v1288 = vld [vmem:[#allocation2 + $0x68] sm:$0xff]
      %v1289 = vld [vmem:[#allocation2 + $0x70] sm:$0xff]
      %v1290 = vld [vmem:[#allocation2 + $0x78] sm:$0xff]
      %v1291 = vld [vmem:[#allocation2 + $0x80] sm:$0xff]
      %v1292 = vld [vmem:[#allocation2 + $0x88] sm:$0xff]
      %v1293 = vld [vmem:[#allocation2 + $0x90] sm:$0x3f]
      %v1294 = vsel %vm805, %v1275, 0.0
      %v1295 = vsel %vm805, %v1276, 0.0
      %v1296 = vadd.f32 %v1294, %v1295
      %v1297 = vsel %vm805, %v1277, 0.0
      %v1298 = vadd.f32 %v1296, %v1297
      %v1299 = vsel %vm805, %v1278, 0.0
      %v1300 = vadd.f32 %v1298, %v1299
      %v1301 = vsel %vm805, %v1279, 0.0
      %v1302 = vadd.f32 %v1300, %v1301
      %v1303 = vsel %vm805, %v1280, 0.0
      %v1304 = vadd.f32 %v1302, %v1303
      %v1305 = vsel %vm805, %v1281, 0.0
      %v1306 = vadd.f32 %v1304, %v1305
      %v1307 = vsel %vm805, %v1282, 0.0
      %v1308 = vadd.f32 %v1306, %v1307
      %v1309 = vsel %vm805, %v1283, 0.0
      %v1310 = vadd.f32 %v1308, %v1309
      %v1311 = vsel %vm805, %v1284, 0.0
      %v1312 = vadd.f32 %v1310, %v1311
      %v1313 = vsel %vm805, %v1285, 0.0
      %v1314 = vadd.f32 %v1312, %v1313
      %v1315 = vsel %vm805, %v1286, 0.0
      %v1316 = vadd.f32 %v1314, %v1315
      %v1317 = vsel %vm805, %v1287, 0.0
      %v1318 = vadd.f32 %v1316, %v1317
      %v1319 = vsel %vm805, %v1288, 0.0
      %v1320 = vadd.f32 %v1318, %v1319
      %v1321 = vsel %vm805, %v1289, 0.0
      %v1322 = vadd.f32 %v1320, %v1321
      %v1323 = vsel %vm805, %v1290, 0.0
      %v1324 = vadd.f32 %v1322, %v1323
      %v1325 = vsel %vm805, %v1291, 0.0
      %v1326 = vadd.f32 %v1324, %v1325
      %v1327 = vsel %vm805, %v1292, 0.0
      %v1328 = vadd.f32 %v1326, %v1327
      %v1329 = vsel %vm824, %v1293, 0.0
      %v1330 = vadd.f32 %v1328, %v1329
      %1331 = vadd.xlane.f32.xlu0 %v1330
      %v1332 = vpop.xlane.xlu0 %1331
      %v1333 = vrot.slane %v1332, 4
      %v1334 = vadd.f32 %v1332, %v1333
      %v1335 = vrot.slane %v1334, 2
      %v1336 = vadd.f32 %v1334, %v1335
      %v1337 = vrot.slane %v1336, 1
      %v1338 = vadd.f32 %v1336, %v1337
      %s1339 = vtos %v1338
      %v1340 = vstv %s1339
      %1341 = vst [vmem:[#allocation9] sm:$0x1] %v1340
      %v1342 = vld [vmem:[#allocation3] sm:$0x1]
      %vm1343 = vcmask 1040384
      %v1344 = vsel %vm1343, %v1342, 0.0
      %1345 = vadd.xlane.f32.xlu0 %v1344
      %v1346 = vpop.xlane.xlu0 %1345
      %v1347 = vrot.slane %v1346, 4
      %v1348 = vadd.f32 %v1346, %v1347
      %v1349 = vrot.slane %v1348, 2
      %v1350 = vadd.f32 %v1348, %v1349
      %v1351 = vrot.slane %v1350, 1
      %v1352 = vadd.f32 %v1350, %v1351
      %s1353 = vtos %v1352
      %v1354 = vstv %s1353
      %1355 = vst [vmem:[#allocation10] sm:$0x1] %v1354
    $region25: #{tpu_custom_call.1} parent=1 // pred_fallthru
      _
    // Predicated region
    $region26: #{tpu_custom_call.1} parent=1 // pred_check
      _
    $region27: #{tpu_custom_call.1} parent=1 // pred_check_branch
      %1357 = sbr.rel (0) target = $region29
    $region28: #{tpu_custom_call.1} parent=1 // pred_region
      %1359 = vsyncadd [#allocation6], 0
      %s1361 = sshll.u32 [#allocation9], 4
      %s1362 = int_to_ptr.vmem [resolvable:$true] %s1361
      %s1363 = sshll.u32 %s2, 4
      %s1364 = int_to_ptr.hbm [resolvable:$true] %s1363
      %1366 = dma.vmem_to_hbm [thread:$0]  %s1362, 16, %s1364, [#allocation6]
    $region29: #{tpu_custom_call.1} parent=1 // pred_fallthru
      _
    // Predicated region
    $region30: #{tpu_custom_call.1} parent=1 // pred_check
      _
    $region31: #{tpu_custom_call.1} parent=1 // pred_check_branch
      %1368 = sbr.rel (0) target = $region33
    $region32: #{tpu_custom_call.1} parent=1 // pred_region
      %1370 = vsyncadd [#allocation11], 0
      %s1372 = sshll.u32 [#allocation10], 4
      %s1373 = int_to_ptr.vmem [resolvable:$true] %s1372
      %s1374 = sshll.u32 %s3, 4
      %s1375 = int_to_ptr.hbm [resolvable:$true] %s1374
      %1377 = dma.vmem_to_hbm [thread:$0]  %s1373, 16, %s1375, [#allocation11]
    $region33: #{tpu_custom_call.1} parent=1 // pred_fallthru
      _
    // Predicated region
    $region34: #{tpu_custom_call.1} parent=1 // pred_check
      _
    $region35: #{tpu_custom_call.1} parent=1 // pred_check_branch
      %1379 = sbr.rel (0) target = $region37
    $region36: #{tpu_custom_call.1} parent=1 // pred_region
      %1381 = dma.done [#allocation6], 16
    $region37: #{tpu_custom_call.1} parent=1 // pred_fallthru
      _
    // Predicated region
    $region38: #{tpu_custom_call.1} parent=1 // pred_check
      _
    $region39: #{tpu_custom_call.1} parent=1 // pred_check_branch
      %1383 = sbr.rel (0) target = $region41
    $region40: #{tpu_custom_call.1} parent=1 // pred_region
      %1385 = dma.done [#allocation11], 16
    $region41: #{tpu_custom_call.1} parent=1 // pred_fallthru
      _
    %1386 = vsyncpa [#allocation5], 1
    %1387 = vsyncpa [#allocation8], 1
    %1388 = vsyncpa [#allocation6], 1
    %1389 = vsyncpa [#allocation11], 1

</llo_original>
